<compile_context>
chip_gen: v7x
topology: tpu7x:2x2x1
jax: 0.10.0
libtpu: 0.0.40
codegen_flags: <defaults>
</compile_context>

<pallas_src>
import functools
import math

import jax
import jax.numpy as jnp
from jax import lax
from jax.experimental import pallas as pl
from jax.experimental.pallas import tpu as pltpu


# ---------------------------------------------------------------------------
# Single fused kernel:
#   cross_ln = LayerNorm(x @ W_t + b)
#   pref     = interact_graph @ table
#   gathered = table[region_idx, :]
# ---------------------------------------------------------------------------
def _fused_forward_kernel(idx_ref,            # SMEM (scalar prefetch): [batch]
                          x_ref,              # [num_cross_regions, cross_dim]
                          w_ref,              # [cross_dim, user_dim] (pre-T)
                          ln_ref,             # [8, user_dim] rows: 0=bias 1=gamma 2=beta
                          graph_ref,          # [num_users, num_regions]
                          table_ref,          # [num_regions, self_dim]
                          gathered_ref,       # [batch, self_dim]
                          pref_ref,           # [num_users, self_dim]
                          cross_ln_ref,       # [num_cross_regions, user_dim]
                          *, eps):
    # --- 1) LayerNorm(Linear(x)) : one MXU push, VPU/EUP epilogue -----------
    y = jnp.dot(x_ref[...], w_ref[...], preferred_element_type=jnp.float32)
    y = y + ln_ref[0:1, :]                                   # bias
    mean = jnp.mean(y, axis=-1, keepdims=True)
    yc = y - mean
    var = jnp.mean(yc * yc, axis=-1, keepdims=True)
    inv = lax.rsqrt(var + eps)
    cross_ln_ref[...] = (yc * inv * ln_ref[1:2, :]           # gamma
                         + ln_ref[2:3, :]).astype(cross_ln_ref.dtype)  # beta

    # --- 2) preference matmul: single K tile -> direct store, no accumulator
    pref_ref[...] = jnp.dot(graph_ref[...], table_ref[...],
                            preferred_element_type=jnp.float32
                            ).astype(pref_ref.dtype)

    # --- 3) exact row gather from the already-resident table ----------------
    # 8 dynamic row reads (SMEM scalar indices), one dense (8,128) store.
    rows = [table_ref[pl.ds(idx_ref[i], 1), :]
            for i in range(gathered_ref.shape[0])]
    gathered_ref[...] = jnp.concatenate(rows, axis=0).astype(gathered_ref.dtype)


def cross_region_forward(params, user_idx, region_idx):
    del user_idx  # unused by the original forward

    x = params["cross_region_embedding"]        # [M, Kc]
    w_t = params["cross_transfer_w_t"]          # [Kc, N]
    ln = params["ln_params"]                    # [8, N]
    graph = params["interact_graph"]            # [U, R]
    table = params["self_region_embedding"]     # [R, D]

    m, kc = x.shape
    kc2, n = w_t.shape
    assert kc == kc2
    u, r = graph.shape
    r2, d = table.shape
    assert r == r2
    b = region_idx.shape[0]

    out_shape = (
        jax.ShapeDtypeStruct((b, d), table.dtype),       # gathered
        jax.ShapeDtypeStruct((u, d), jnp.float32),       # self_region_preference
        jax.ShapeDtypeStruct((m, n), jnp.float32),       # cross_ln
    )

    grid_spec = pltpu.PrefetchScalarGridSpec(
        num_scalar_prefetch=1,                  # region_idx -> SMEM
        grid=(1,),                              # everything fits VMEM: one step
        in_specs=[
            pl.BlockSpec((m, kc), lambda i, idx: (0, 0)),
            pl.BlockSpec((kc, n), lambda i, idx: (0, 0)),
            pl.BlockSpec((8, n), lambda i, idx: (0, 0)),
            pl.BlockSpec((u, r), lambda i, idx: (0, 0)),
            pl.BlockSpec((r, d), lambda i, idx: (0, 0)),
        ],
        out_specs=(
            pl.BlockSpec((b, d), lambda i, idx: (0, 0)),
            pl.BlockSpec((u, d), lambda i, idx: (0, 0)),
            pl.BlockSpec((m, n), lambda i, idx: (0, 0)),
        ),
    )

    return pl.pallas_call(
        functools.partial(_fused_forward_kernel, eps=1e-5),
        out_shape=out_shape,
        grid_spec=grid_spec,
        compiler_params=pltpu.CompilerParams(
            dimension_semantics=("arbitrary",),
            vmem_limit_bytes=32 * 1024 * 1024,   # safe scoped limit on all gens
        ),
    )(region_idx, x, w_t, ln, graph, table)


if __name__ == "__main__":
    # Small, lane/sublane-aligned shapes (feature dims multiples of 128,
    # batch dims multiples of 8) -> every store is a dense, unmasked vst.
    user_embed_dim = 128      # N
    cross_region_dim = 256    # input dim of cross_transfer_layer
    num_cross_regions = 256   # rows of cross_region_embedding
    self_region_dim = 128     # nn.Embedding feature dim
    num_regions = 256         # nn.Embedding rows / interact_graph cols
    num_users = 256           # interact_graph rows
    batch = 8                 # number of region_idx lookups

    key = jax.random.PRNGKey(0)
    ks = jax.random.split(key, 6)

    cross_region_embedding = jax.random.normal(
        ks[0], (num_cross_regions, cross_region_dim), jnp.float32)
    self_region_embedding = jax.random.normal(
        ks[1], (num_regions, self_region_dim), jnp.float32)
    interact_graph = jax.random.normal(
        ks[2], (num_users, num_regions), jnp.float32)

    # nn.Linear(cross_region_dim, user_embed_dim) default init
    bound = 1.0 / math.sqrt(cross_region_dim)
    w = jax.random.uniform(ks[3], (user_embed_dim, cross_region_dim),
                           jnp.float32, -bound, bound)
    b = jax.random.uniform(ks[4], (user_embed_dim,),
                           jnp.float32, -bound, bound)

    region_idx = jax.random.randint(ks[5], (batch,), 0, num_regions,
                                    dtype=jnp.int32)
    user_idx = jnp.arange(batch, dtype=jnp.int32)

    # Pack bias / gamma / beta into ONE sublane-aligned (8, N) buffer at init.
    ln_params = jnp.zeros((8, user_embed_dim), jnp.float32)
    ln_params = ln_params.at[0].set(b)                                 # bias
    ln_params = ln_params.at[1].set(jnp.ones((user_embed_dim,)))       # gamma
    ln_params = ln_params.at[2].set(jnp.zeros((user_embed_dim,)))      # beta

    params = {
        "cross_region_embedding": cross_region_embedding,
        "self_region_embedding": self_region_embedding,
        "interact_graph": interact_graph,
        "cross_transfer_w_t": jnp.asarray(w.T),     # transpose ONCE at init
        "ln_params": ln_params,
    }

    gathered, pref, cross_ln = jax.block_until_ready(
        cross_region_forward(params, user_idx, region_idx))

    # ---- plain-JAX reference (same semantics as the PyTorch module) ----
    y_ref = jnp.dot(cross_region_embedding, params["cross_transfer_w_t"],
                    precision=lax.Precision.HIGHEST) + b[None, :]
    mean = jnp.mean(y_ref, axis=-1, keepdims=True)
    var = jnp.mean((y_ref - mean) ** 2, axis=-1, keepdims=True)
    cross_ln_ref = (y_ref - mean) / jnp.sqrt(var + 1e-5)
    pref_ref = jnp.dot(interact_graph, self_region_embedding,
                       precision=lax.Precision.HIGHEST)
    gathered_ref = self_region_embedding[region_idx]

    assert gathered.shape == (batch, self_region_dim)
    assert pref.shape == (num_users, self_region_dim)
    assert cross_ln.shape == (num_cross_regions, user_embed_dim)
    assert jnp.allclose(gathered, gathered_ref)
    assert jnp.allclose(pref, pref_ref, atol=1e-3, rtol=1e-3)
    assert jnp.allclose(cross_ln, cross_ln_ref, atol=1e-3, rtol=1e-3)

    print("KERNEL_OK")
</pallas_src>

<mosaic_0001>
module attributes {stable_mosaic.version = 11 : i64} {
  func.func @_fused_forward_kernel(%arg0: i32, %arg1: memref<8xi32, #tpu.memory_space<smem>>, %arg2: memref<256x256xf32, #tpu.memory_space<vmem>>, %arg3: memref<256x128xf32, #tpu.memory_space<vmem>>, %arg4: memref<8x128xf32, #tpu.memory_space<vmem>>, %arg5: memref<256x256xf32, #tpu.memory_space<vmem>>, %arg6: memref<256x128xf32, #tpu.memory_space<vmem>>, %arg7: memref<8x128xf32, #tpu.memory_space<vmem>>, %arg8: memref<256x128xf32, #tpu.memory_space<vmem>>, %arg9: memref<256x128xf32, #tpu.memory_space<vmem>>) attributes {dimension_semantics = [#tpu.dimension_semantics<arbitrary>], iteration_bounds = array<i64: 1>, scalar_prefetch = 1 : i64, scratch_operands = 0 : i64, tpu.core_type = #tpu.core_type<tc>, window_params = [{pipeline_mode = #tpu.pipeline_mode<synchronous>, transform_indices = @transform_0, window_bounds = array<i64: 256, 256>}, {pipeline_mode = #tpu.pipeline_mode<synchronous>, transform_indices = @transform_1, window_bounds = array<i64: 256, 128>}, {pipeline_mode = #tpu.pipeline_mode<synchronous>, transform_indices = @transform_2, window_bounds = array<i64: 8, 128>}, {pipeline_mode = #tpu.pipeline_mode<synchronous>, transform_indices = @transform_3, window_bounds = array<i64: 256, 256>}, {pipeline_mode = #tpu.pipeline_mode<synchronous>, transform_indices = @transform_4, window_bounds = array<i64: 256, 128>}, {pipeline_mode = #tpu.pipeline_mode<synchronous>, transform_indices = @transform_5, window_bounds = array<i64: 8, 128>}, {pipeline_mode = #tpu.pipeline_mode<synchronous>, transform_indices = @transform_6, window_bounds = array<i64: 256, 128>}, {pipeline_mode = #tpu.pipeline_mode<synchronous>, transform_indices = @transform_7, window_bounds = array<i64: 256, 128>}]} {
    %c0 = arith.constant 0 : index
    %c0_0 = arith.constant 0 : index
    %0 = vector.load %arg2[%c0, %c0_0] : memref<256x256xf32, #tpu.memory_space<vmem>>, vector<256x256xf32>
    %c0_1 = arith.constant 0 : index
    %c0_2 = arith.constant 0 : index
    %1 = vector.load %arg3[%c0_1, %c0_2] : memref<256x128xf32, #tpu.memory_space<vmem>>, vector<256x128xf32>
    %cst = arith.constant dense<0.000000e+00> : vector<256x128xf32>
    %2 = tpu.matmul %0, %1, %cst {dimension_numbers = #tpu.dot_dimension_numbers<[1], [0], [0], [1], [0, 0, 1, 1], [], []>} : vector<256x256xf32>, vector<256x128xf32>, vector<256x128xf32> -> vector<256x128xf32>
    %c0_3 = arith.constant 0 : index
    %c0_4 = arith.constant 0 : index
    %3 = vector.load %arg4[%c0_3, %c0_4] : memref<8x128xf32, #tpu.memory_space<vmem>>, vector<1x128xf32>
    %4 = vector.broadcast %3 : vector<1x128xf32> to vector<256x128xf32>
    %5 = arith.addf %2, %4 : vector<256x128xf32>
    %cst_5 = arith.constant dense<0.000000e+00> : vector<256xf32>
    %6 = vector.multi_reduction <add>, %5, %cst_5 [1] : vector<256x128xf32> to vector<256xf32>
    %7 = vector.shape_cast %6 : vector<256xf32> to vector<256x1xf32>
    %cst_6 = arith.constant 1.280000e+02 : f32
    %8 = vector.broadcast %cst_6 : f32 to vector<256x1xf32>
    %9 = arith.divf %7, %8 : vector<256x1xf32>
    %10 = vector.broadcast %9 : vector<256x1xf32> to vector<256x128xf32>
    %11 = arith.subf %5, %10 : vector<256x128xf32>
    %12 = arith.mulf %11, %11 : vector<256x128xf32>
    %cst_7 = arith.constant dense<0.000000e+00> : vector<256xf32>
    %13 = vector.multi_reduction <add>, %12, %cst_7 [1] : vector<256x128xf32> to vector<256xf32>
    %14 = vector.shape_cast %13 : vector<256xf32> to vector<256x1xf32>
    %cst_8 = arith.constant 1.280000e+02 : f32
    %15 = vector.broadcast %cst_8 : f32 to vector<256x1xf32>
    %16 = arith.divf %14, %15 : vector<256x1xf32>
    %cst_9 = arith.constant 9.99999974E-6 : f32
    %17 = vector.broadcast %cst_9 : f32 to vector<256x1xf32>
    %18 = arith.addf %16, %17 : vector<256x1xf32>
    %19 = math.rsqrt %18 : vector<256x1xf32>
    %20 = vector.broadcast %19 : vector<256x1xf32> to vector<256x128xf32>
    %21 = arith.mulf %11, %20 : vector<256x128xf32>
    %c1 = arith.constant 1 : index
    %c0_10 = arith.constant 0 : index
    %22 = vector.load %arg4[%c1, %c0_10] : memref<8x128xf32, #tpu.memory_space<vmem>>, vector<1x128xf32>
    %23 = vector.broadcast %22 : vector<1x128xf32> to vector<256x128xf32>
    %24 = arith.mulf %21, %23 : vector<256x128xf32>
    %c2 = arith.constant 2 : index
    %c0_11 = arith.constant 0 : index
    %25 = vector.load %arg4[%c2, %c0_11] : memref<8x128xf32, #tpu.memory_space<vmem>>, vector<1x128xf32>
    %26 = vector.broadcast %25 : vector<1x128xf32> to vector<256x128xf32>
    %27 = arith.addf %24, %26 : vector<256x128xf32>
    %c0_12 = arith.constant 0 : index
    %c0_13 = arith.constant 0 : index
    %28 = vector.load %arg9[%c0_12, %c0_13] : memref<256x128xf32, #tpu.memory_space<vmem>>, vector<256x128xf32>
    tpu.vector_store %arg9[%c0_12, %c0_13], %27 {strides = array<i32>} : memref<256x128xf32, #tpu.memory_space<vmem>>, vector<256x128xf32>,
    %c0_14 = arith.constant 0 : index
    %c0_15 = arith.constant 0 : index
    %29 = vector.load %arg5[%c0_14, %c0_15] : memref<256x256xf32, #tpu.memory_space<vmem>>, vector<256x256xf32>
    %c0_16 = arith.constant 0 : index
    %c0_17 = arith.constant 0 : index
    %30 = vector.load %arg6[%c0_16, %c0_17] : memref<256x128xf32, #tpu.memory_space<vmem>>, vector<256x128xf32>
    %cst_18 = arith.constant dense<0.000000e+00> : vector<256x128xf32>
    %31 = tpu.matmul %29, %30, %cst_18 {dimension_numbers = #tpu.dot_dimension_numbers<[1], [0], [0], [1], [0, 0, 1, 1], [], []>} : vector<256x256xf32>, vector<256x128xf32>, vector<256x128xf32> -> vector<256x128xf32>
    %c0_19 = arith.constant 0 : index
    %c0_20 = arith.constant 0 : index
    %32 = vector.load %arg8[%c0_19, %c0_20] : memref<256x128xf32, #tpu.memory_space<vmem>>, vector<256x128xf32>
    tpu.vector_store %arg8[%c0_19, %c0_20], %31 {strides = array<i32>} : memref<256x128xf32, #tpu.memory_space<vmem>>, vector<256x128xf32>,
    %c0_21 = arith.constant 0 : index
    %33 = memref.load %arg1[%c0_21] : memref<8xi32, #tpu.memory_space<smem>>
    %34 = arith.index_cast %33 : i32 to index
    %c0_22 = arith.constant 0 : index
    %35 = vector.load %arg6[%34, %c0_22] : memref<256x128xf32, #tpu.memory_space<vmem>>, vector<1x128xf32>
    %c1_23 = arith.constant 1 : index
    %36 = memref.load %arg1[%c1_23] : memref<8xi32, #tpu.memory_space<smem>>
    %37 = arith.index_cast %36 : i32 to index
    %c0_24 = arith.constant 0 : index
    %38 = vector.load %arg6[%37, %c0_24] : memref<256x128xf32, #tpu.memory_space<vmem>>, vector<1x128xf32>
    %c2_25 = arith.constant 2 : index
    %39 = memref.load %arg1[%c2_25] : memref<8xi32, #tpu.memory_space<smem>>
    %40 = arith.index_cast %39 : i32 to index
    %c0_26 = arith.constant 0 : index
    %41 = vector.load %arg6[%40, %c0_26] : memref<256x128xf32, #tpu.memory_space<vmem>>, vector<1x128xf32>
    %c3 = arith.constant 3 : index
    %42 = memref.load %arg1[%c3] : memref<8xi32, #tpu.memory_space<smem>>
    %43 = arith.index_cast %42 : i32 to index
    %c0_27 = arith.constant 0 : index
    %44 = vector.load %arg6[%43, %c0_27] : memref<256x128xf32, #tpu.memory_space<vmem>>, vector<1x128xf32>
    %c4 = arith.constant 4 : index
    %45 = memref.load %arg1[%c4] : memref<8xi32, #tpu.memory_space<smem>>
    %46 = arith.index_cast %45 : i32 to index
    %c0_28 = arith.constant 0 : index
    %47 = vector.load %arg6[%46, %c0_28] : memref<256x128xf32, #tpu.memory_space<vmem>>, vector<1x128xf32>
    %c5 = arith.constant 5 : index
    %48 = memref.load %arg1[%c5] : memref<8xi32, #tpu.memory_space<smem>>
    %49 = arith.index_cast %48 : i32 to index
    %c0_29 = arith.constant 0 : index
    %50 = vector.load %arg6[%49, %c0_29] : memref<256x128xf32, #tpu.memory_space<vmem>>, vector<1x128xf32>
    %c6 = arith.constant 6 : index
    %51 = memref.load %arg1[%c6] : memref<8xi32, #tpu.memory_space<smem>>
    %52 = arith.index_cast %51 : i32 to index
    %c0_30 = arith.constant 0 : index
    %53 = vector.load %arg6[%52, %c0_30] : memref<256x128xf32, #tpu.memory_space<vmem>>, vector<1x128xf32>
    %c7 = arith.constant 7 : index
    %54 = memref.load %arg1[%c7] : memref<8xi32, #tpu.memory_space<smem>>
    %55 = arith.index_cast %54 : i32 to index
    %c0_31 = arith.constant 0 : index
    %56 = vector.load %arg6[%55, %c0_31] : memref<256x128xf32, #tpu.memory_space<vmem>>, vector<1x128xf32>
    %57 = tpu.concatenate %35, %38, %41, %44, %47, %50, %53, %56 in 0 : vector<1x128xf32>, vector<1x128xf32>, vector<1x128xf32>, vector<1x128xf32>, vector<1x128xf32>, vector<1x128xf32>, vector<1x128xf32>, vector<1x128xf32> -> vector<8x128xf32>
    %c0_32 = arith.constant 0 : index
    %c0_33 = arith.constant 0 : index
    %58 = vector.load %arg7[%c0_32, %c0_33] : memref<8x128xf32, #tpu.memory_space<vmem>>, vector<8x128xf32>
    tpu.vector_store %arg7[%c0_32, %c0_33], %57 {strides = array<i32>} : memref<8x128xf32, #tpu.memory_space<vmem>>, vector<8x128xf32>,
    return
  }
  func.func @transform_0(%arg0: i32, %arg1: memref<8xi32, #tpu.memory_space<smem>>) -> (i32, i32) {
    %c0_i32 = arith.constant 0 : i32
    %c0_i32_0 = arith.constant 0 : i32
    %c0_i32_1 = arith.constant 0 : i32
    return %c0_i32, %c0_i32_0 : i32, i32
  }
  func.func @transform_1(%arg0: i32, %arg1: memref<8xi32, #tpu.memory_space<smem>>) -> (i32, i32) {
    %c0_i32 = arith.constant 0 : i32
    %c0_i32_0 = arith.constant 0 : i32
    %c0_i32_1 = arith.constant 0 : i32
    return %c0_i32, %c0_i32_0 : i32, i32
  }
  func.func @transform_2(%arg0: i32, %arg1: memref<8xi32, #tpu.memory_space<smem>>) -> (i32, i32) {
    %c0_i32 = arith.constant 0 : i32
    %c0_i32_0 = arith.constant 0 : i32
    %c0_i32_1 = arith.constant 0 : i32
    return %c0_i32, %c0_i32_0 : i32, i32
  }
  func.func @transform_3(%arg0: i32, %arg1: memref<8xi32, #tpu.memory_space<smem>>) -> (i32, i32) {
    %c0_i32 = arith.constant 0 : i32
    %c0_i32_0 = arith.constant 0 : i32
    %c0_i32_1 = arith.constant 0 : i32
    return %c0_i32, %c0_i32_0 : i32, i32
  }
  func.func @transform_4(%arg0: i32, %arg1: memref<8xi32, #tpu.memory_space<smem>>) -> (i32, i32) {
    %c0_i32 = arith.constant 0 : i32
    %c0_i32_0 = arith.constant 0 : i32
    %c0_i32_1 = arith.constant 0 : i32
    return %c0_i32, %c0_i32_0 : i32, i32
  }
  func.func @transform_5(%arg0: i32, %arg1: memref<8xi32, #tpu.memory_space<smem>>) -> (i32, i32) {
    %c0_i32 = arith.constant 0 : i32
    %c0_i32_0 = arith.constant 0 : i32
    %c0_i32_1 = arith.constant 0 : i32
    return %c0_i32, %c0_i32_0 : i32, i32
  }
  func.func @transform_6(%arg0: i32, %arg1: memref<8xi32, #tpu.memory_space<smem>>) -> (i32, i32) {
    %c0_i32 = arith.constant 0 : i32
    %c0_i32_0 = arith.constant 0 : i32
    %c0_i32_1 = arith.constant 0 : i32
    return %c0_i32, %c0_i32_0 : i32, i32
  }
  func.func @transform_7(%arg0: i32, %arg1: memref<8xi32, #tpu.memory_space<smem>>) -> (i32, i32) {
    %c0_i32 = arith.constant 0 : i32
    %c0_i32_0 = arith.constant 0 : i32
    %c0_i32_1 = arith.constant 0 : i32
    return %c0_i32, %c0_i32_0 : i32, i32
  }
}

</mosaic_0001>

<llo_original>
// kernel: tpu_custom_call.1
$region0: #{tpu_custom_call.1}
  #allocation0 [shape = 'u32[]', space=smem, size = 0x4, offset = 0x4, fixed_abs, tag = 'smem constant byte address 0x4 - core index']
  #allocation1 [shape = 'u32[144,128]{1,0:T(1,128)}', space=vmem, size = 0x12000, scoped, tag = 'internal scratch']
  #allocation2 [shape = 's32[1]{0}', space=sflag, size = 0x4, scoped, tag = 'scoped memory for tpu_custom_call.1']
  #allocation3 [shape = 'u8[512]{0}', space=smem, size = 0x200, scoped, tag = 'prefetched SMEM operand 0']
  %s0 = inlined_call_operand.hbm [shape: s32[8], index: 0, kind: input, shape index: {}]
  %s1 = inlined_call_operand.hbm [shape: f32[256,256], index: 1, kind: input, shape index: {}]
  %s2 = inlined_call_operand.hbm [shape: f32[256,128], index: 2, kind: input, shape index: {}]
  %s3 = inlined_call_operand.vmem [shape: f32[8,128], index: 3, kind: input, shape index: {}]
  %s4 = inlined_call_operand.hbm [shape: f32[256,256], index: 4, kind: input, shape index: {}]
  %s5 = inlined_call_operand.hbm [shape: f32[256,128], index: 5, kind: input, shape index: {}]
  %s6 = inlined_call_operand.hbm [shape: f32[8,128], index: 6, kind: output, shape index: {0}]
  %s7 = inlined_call_operand.hbm [shape: f32[256,128], index: 7, kind: output, shape index: {1}]
  %s8 = inlined_call_operand.hbm [shape: f32[256,128], index: 8, kind: output, shape index: {2}]
  %9 = xla_tuple %s6, %s7, %s8
  %s10 = sld [smem:[#allocation0]]
  $region62: #{tpu_custom_call.1} parent=0
    _
  %s12 = ssub.s32 1, %s10
  %s13 = scalar_select 0, %s12, %s10
  %15 = dma.hbm_to_smem %s0, 16, [#allocation3], [#allocation2]
  %16 = dma.done [#allocation2], 16
  %17 = sfence
  $region1: #{tpu_custom_call.1} parent=0
    #allocation4 [shape = 'u8[262144]{0}', space=vmem, size = 0x40000, scoped, tag = 'input window, operand 1, single buffered']
    #allocation5 [shape = 's32[1]{0}', space=sflag, size = 0x4, scoped, tag = 'scoped memory for tpu_custom_call.1']
    #allocation6 [shape = 's32[1]{0}', space=sflag, size = 0x4, scoped, tag = 'scoped memory for tpu_custom_call.1']
    #allocation7 [shape = 'u8[131072]{0}', space=vmem, size = 0x20000, scoped, tag = 'input window, operand 2, single buffered']
    #allocation8 [shape = 's32[1]{0}', space=sflag, size = 0x4, scoped, tag = 'scoped memory for tpu_custom_call.1']
    #allocation9 [shape = 'u8[262144]{0}', space=vmem, size = 0x40000, scoped, tag = 'input window, operand 4, single buffered']
    #allocation10 [shape = 'u8[131072]{0}', space=vmem, size = 0x20000, scoped, tag = 'input window, operand 5, single buffered']
    #allocation11 [shape = 's32[1]{0}', space=sflag, size = 0x4, scoped, tag = 'scoped memory for tpu_custom_call.1']
    #allocation12 [shape = 'u8[4096]{0}', space=vmem, size = 0x1000, scoped, tag = 'output window, operand 0, single buffered']
    #allocation13 [shape = 'u8[131072]{0}', space=vmem, size = 0x20000, scoped, tag = 'output window, operand 1, single buffered']
    #allocation14 [shape = 's32[1]{0}', space=sflag, size = 0x4, scoped, tag = 'scoped memory for tpu_custom_call.1']
    #allocation15 [shape = 'u8[131072]{0}', space=vmem, size = 0x20000, scoped, tag = 'output window, operand 2, single buffered']
    %18 = vsyncpa [#allocation5], 0
    %19 = vsyncpa [#allocation8], 0
    %20 = vsyncpa [#allocation11], 0
    %21 = vsyncpa [#allocation6], 0
    %22 = vsyncpa [#allocation14], 0
    // Predicated region
    $region2: #{tpu_custom_call.1} parent=1 // pred_check
      _
    $region3: #{tpu_custom_call.1} parent=1 // pred_check_branch
      %24 = sbr.rel (0) target = $region5
    $region4: #{tpu_custom_call.1} parent=1 // pred_region
      %s26 = ssub.s32 8192, 8192
      %27 = vsyncadd [#allocation5], %s26
      %s28 = sshll.u32 [#allocation4], 4
      %s29 = int_to_ptr.vmem [resolvable:$true] %s28
      %34 = dma.hbm_to_vmem [thread:$0]  %s1, 8192, %s29, [#allocation5], 256, 256, 16
    $region5: #{tpu_custom_call.1} parent=1 // pred_fallthru
      _
    // Predicated region
    $region6: #{tpu_custom_call.1} parent=1 // pred_check
      _
    $region7: #{tpu_custom_call.1} parent=1 // pred_check_branch
      %36 = sbr.rel (0) target = $region9
    $region8: #{tpu_custom_call.1} parent=1 // pred_region
      %s38 = ssub.s32 4096, 4096
      %39 = vsyncadd [#allocation8], %s38
      %s40 = sshll.u32 [#allocation7], 4
      %s41 = int_to_ptr.vmem [resolvable:$true] %s40
      %46 = dma.hbm_to_vmem [thread:$0]  %s2, 4096, %s41, [#allocation8], 128, 128, 8
    $region9: #{tpu_custom_call.1} parent=1 // pred_fallthru
      _
    // Predicated region
    $region10: #{tpu_custom_call.1} parent=1 // pred_check
      _
    $region11: #{tpu_custom_call.1} parent=1 // pred_check_branch
      %48 = sbr.rel (0) target = $region13
    $region12: #{tpu_custom_call.1} parent=1 // pred_region
      _
    $region13: #{tpu_custom_call.1} parent=1 // pred_fallthru
      _
    // Predicated region
    $region14: #{tpu_custom_call.1} parent=1 // pred_check
      _
    $region15: #{tpu_custom_call.1} parent=1 // pred_check_branch
      %50 = sbr.rel (0) target = $region17
    $region16: #{tpu_custom_call.1} parent=1 // pred_region
      %s52 = ssub.s32 8192, 8192
      %53 = vsyncadd [#allocation8], %s52
      %s54 = sshll.u32 [#allocation9], 4
      %s55 = int_to_ptr.vmem [resolvable:$true] %s54
      %60 = dma.hbm_to_vmem [thread:$0]  %s4, 8192, %s55, [#allocation8], 256, 256, 16
    $region17: #{tpu_custom_call.1} parent=1 // pred_fallthru
      _
    // Predicated region
    $region18: #{tpu_custom_call.1} parent=1 // pred_check
      _
    $region19: #{tpu_custom_call.1} parent=1 // pred_check_branch
      %62 = sbr.rel (0) target = $region21
    $region20: #{tpu_custom_call.1} parent=1 // pred_region
      %s64 = ssub.s32 4096, 4096
      %65 = vsyncadd [#allocation11], %s64
      %s66 = sshll.u32 [#allocation10], 4
      %s67 = int_to_ptr.vmem [resolvable:$true] %s66
      %72 = dma.hbm_to_vmem [thread:$0]  %s5, 4096, %s67, [#allocation11], 128, 128, 8
    $region21: #{tpu_custom_call.1} parent=1 // pred_fallthru
      _
    // Predicated region
    $region22: #{tpu_custom_call.1} parent=1 // pred_check
      _
    $region23: #{tpu_custom_call.1} parent=1 // pred_check_branch
      %74 = sbr.rel (0) target = $region25
    $region24: #{tpu_custom_call.1} parent=1 // pred_region
      %75 = dma.done [#allocation5], 8192
    $region25: #{tpu_custom_call.1} parent=1 // pred_fallthru
      _
    // Predicated region
    $region26: #{tpu_custom_call.1} parent=1 // pred_check
      _
    $region27: #{tpu_custom_call.1} parent=1 // pred_check_branch
      %77 = sbr.rel (0) target = $region29
    $region28: #{tpu_custom_call.1} parent=1 // pred_region
      %78 = dma.done [#allocation8], 4096
    $region29: #{tpu_custom_call.1} parent=1 // pred_fallthru
      _
    // Predicated region
    $region30: #{tpu_custom_call.1} parent=1 // pred_check
      _
    $region31: #{tpu_custom_call.1} parent=1 // pred_check_branch
      %80 = sbr.rel (0) target = $region33
    $region32: #{tpu_custom_call.1} parent=1 // pred_region
      %81 = dma.done [#allocation8], 8192
    $region33: #{tpu_custom_call.1} parent=1 // pred_fallthru
      _
    // Predicated region
    $region34: #{tpu_custom_call.1} parent=1 // pred_check
      _
    $region35: #{tpu_custom_call.1} parent=1 // pred_check_branch
      %83 = sbr.rel (0) target = $region37
    $region36: #{tpu_custom_call.1} parent=1 // pred_region
      %84 = dma.done [#allocation11], 4096
    $region37: #{tpu_custom_call.1} parent=1 // pred_fallthru
      _
    %v85 = vld [vmem:[#allocation4] sm:$0xff]
    %v86 = vld [vmem:[#allocation4 + $0x8] sm:$0xff]
    %v87 = vld [vmem:[#allocation4 + $0x10] sm:$0xff]
    %v88 = vld [vmem:[#allocation4 + $0x18] sm:$0xff]
    %v89 = vld [vmem:[#allocation4 + $0x20] sm:$0xff]
    %v90 = vld [vmem:[#allocation4 + $0x28] sm:$0xff]
    %v91 = vld [vmem:[#allocation4 + $0x30] sm:$0xff]
    %v92 = vld [vmem:[#allocation4 + $0x38] sm:$0xff]
    %v93 = vld [vmem:[#allocation4 + $0x40] sm:$0xff]
    %v94 = vld [vmem:[#allocation4 + $0x48] sm:$0xff]
    %v95 = vld [vmem:[#allocation4 + $0x50] sm:$0xff]
    %v96 = vld [vmem:[#allocation4 + $0x58] sm:$0xff]
    %v97 = vld [vmem:[#allocation4 + $0x60] sm:$0xff]
    %v98 = vld [vmem:[#allocation4 + $0x68] sm:$0xff]
    %v99 = vld [vmem:[#allocation4 + $0x70] sm:$0xff]
    %v100 = vld [vmem:[#allocation4 + $0x78] sm:$0xff]
    %v101 = vld [vmem:[#allocation4 + $0x80] sm:$0xff]
    %v102 = vld [vmem:[#allocation4 + $0x88] sm:$0xff]
    %v103 = vld [vmem:[#allocation4 + $0x90] sm:$0xff]
    %v104 = vld [vmem:[#allocation4 + $0x98] sm:$0xff]
    %v105 = vld [vmem:[#allocation4 + $0xa0] sm:$0xff]
    %v106 = vld [vmem:[#allocation4 + $0xa8] sm:$0xff]
    %v107 = vld [vmem:[#allocation4 + $0xb0] sm:$0xff]
    %v108 = vld [vmem:[#allocation4 + $0xb8] sm:$0xff]
    %v109 = vld [vmem:[#allocation4 + $0xc0] sm:$0xff]
    %v110 = vld [vmem:[#allocation4 + $0xc8] sm:$0xff]
    %v111 = vld [vmem:[#allocation4 + $0xd0] sm:$0xff]
    %v112 = vld [vmem:[#allocation4 + $0xd8] sm:$0xff]
    %v113 = vld [vmem:[#allocation4 + $0xe0] sm:$0xff]
    %v114 = vld [vmem:[#allocation4 + $0xe8] sm:$0xff]
    %v115 = vld [vmem:[#allocation4 + $0xf0] sm:$0xff]
    %v116 = vld [vmem:[#allocation4 + $0xf8] sm:$0xff]
    %v117 = vld [vmem:[#allocation4 + $0x100] sm:$0xff]
    %v118 = vld [vmem:[#allocation4 + $0x108] sm:$0xff]
    %v119 = vld [vmem:[#allocation4 + $0x110] sm:$0xff]
    %v120 = vld [vmem:[#allocation4 + $0x118] sm:$0xff]
    %v121 = vld [vmem:[#allocation4 + $0x120] sm:$0xff]
    %v122 = vld [vmem:[#allocation4 + $0x128] sm:$0xff]
    %v123 = vld [vmem:[#allocation4 + $0x130] sm:$0xff]
    %v124 = vld [vmem:[#allocation4 + $0x138] sm:$0xff]
    %v125 = vld [vmem:[#allocation4 + $0x140] sm:$0xff]
    %v126 = vld [vmem:[#allocation4 + $0x148] sm:$0xff]
    %v127 = vld [vmem:[#allocation4 + $0x150] sm:$0xff]
    %v128 = vld [vmem:[#allocation4 + $0x158] sm:$0xff]
    %v129 = vld [vmem:[#allocation4 + $0x160] sm:$0xff]
    %v130 = vld [vmem:[#allocation4 + $0x168] sm:$0xff]
    %v131 = vld [vmem:[#allocation4 + $0x170] sm:$0xff]
    %v132 = vld [vmem:[#allocation4 + $0x178] sm:$0xff]
    %v133 = vld [vmem:[#allocation4 + $0x180] sm:$0xff]
    %v134 = vld [vmem:[#allocation4 + $0x188] sm:$0xff]
    %v135 = vld [vmem:[#allocation4 + $0x190] sm:$0xff]
    %v136 = vld [vmem:[#allocation4 + $0x198] sm:$0xff]
    %v137 = vld [vmem:[#allocation4 + $0x1a0] sm:$0xff]
    %v138 = vld [vmem:[#allocation4 + $0x1a8] sm:$0xff]
    %v139 = vld [vmem:[#allocation4 + $0x1b0] sm:$0xff]
    %v140 = vld [vmem:[#allocation4 + $0x1b8] sm:$0xff]
    %v141 = vld [vmem:[#allocation4 + $0x1c0] sm:$0xff]
    %v142 = vld [vmem:[#allocation4 + $0x1c8] sm:$0xff]
    %v143 = vld [vmem:[#allocation4 + $0x1d0] sm:$0xff]
    %v144 = vld [vmem:[#allocation4 + $0x1d8] sm:$0xff]
    %v145 = vld [vmem:[#allocation4 + $0x1e0] sm:$0xff]
    %v146 = vld [vmem:[#allocation4 + $0x1e8] sm:$0xff]
    %v147 = vld [vmem:[#allocation4 + $0x1f0] sm:$0xff]
    %v148 = vld [vmem:[#allocation4 + $0x1f8] sm:$0xff]
    %v149 = vld [vmem:[#allocation7] sm:$0xff]
    %v150 = vld [vmem:[#allocation7 + $0x8] sm:$0xff]
    %v151 = vld [vmem:[#allocation7 + $0x10] sm:$0xff]
    %v152 = vld [vmem:[#allocation7 + $0x18] sm:$0xff]
    %v153 = vld [vmem:[#allocation7 + $0x20] sm:$0xff]
    %v154 = vld [vmem:[#allocation7 + $0x28] sm:$0xff]
    %v155 = vld [vmem:[#allocation7 + $0x30] sm:$0xff]
    %v156 = vld [vmem:[#allocation7 + $0x38] sm:$0xff]
    %v157 = vld [vmem:[#allocation7 + $0x40] sm:$0xff]
    %v158 = vld [vmem:[#allocation7 + $0x48] sm:$0xff]
    %v159 = vld [vmem:[#allocation7 + $0x50] sm:$0xff]
    %v160 = vld [vmem:[#allocation7 + $0x58] sm:$0xff]
    %v161 = vld [vmem:[#allocation7 + $0x60] sm:$0xff]
    %v162 = vld [vmem:[#allocation7 + $0x68] sm:$0xff]
    %v163 = vld [vmem:[#allocation7 + $0x70] sm:$0xff]
    %v164 = vld [vmem:[#allocation7 + $0x78] sm:$0xff]
    %v165 = vld [vmem:[#allocation7 + $0x80] sm:$0xff]
    %v166 = vld [vmem:[#allocation7 + $0x88] sm:$0xff]
    %v167 = vld [vmem:[#allocation7 + $0x90] sm:$0xff]
    %v168 = vld [vmem:[#allocation7 + $0x98] sm:$0xff]
    %v169 = vld [vmem:[#allocation7 + $0xa0] sm:$0xff]
    %v170 = vld [vmem:[#allocation7 + $0xa8] sm:$0xff]
    %v171 = vld [vmem:[#allocation7 + $0xb0] sm:$0xff]
    %v172 = vld [vmem:[#allocation7 + $0xb8] sm:$0xff]
    %v173 = vld [vmem:[#allocation7 + $0xc0] sm:$0xff]
    %v174 = vld [vmem:[#allocation7 + $0xc8] sm:$0xff]
    %v175 = vld [vmem:[#allocation7 + $0xd0] sm:$0xff]
    %v176 = vld [vmem:[#allocation7 + $0xd8] sm:$0xff]
    %v177 = vld [vmem:[#allocation7 + $0xe0] sm:$0xff]
    %v178 = vld [vmem:[#allocation7 + $0xe8] sm:$0xff]
    %v179 = vld [vmem:[#allocation7 + $0xf0] sm:$0xff]
    %v180 = vld [vmem:[#allocation7 + $0xf8] sm:$0xff]
    %v181 = vld [vmem:[%s3] sm:$0x1]
    %v182 = vlaneseq
    %v183 = vshrl.u32 %v182, 7
    %v184 = vsub.s32 0, %v183
    %v185 = vrot.slane %v181, %v184
    %186 = vmatprep.subr.mxu0 0.0
    %187 = vmatpush1.msra.mxu0 %v149
    %188 = vmatprep.subr.mxu0 0.0
    %189 = vmatpush1.msra.mxu0 %v150
    %190 = vmatprep.subr.mxu0 0.0
    %191 = vmatpush1.msra.mxu0 %v151
    %192 = vmatprep.subr.mxu0 0.0
    %193 = vmatpush1.msra.mxu0 %v152
    %194 = vmatprep.subr.mxu0 0.0
    %195 = vmatpush1.msra.mxu0 %v153
    %196 = vmatprep.subr.mxu0 0.0
    %197 = vmatpush1.msra.mxu0 %v154
    %198 = vmatprep.subr.mxu0 0.0
    %199 = vmatpush1.msra.mxu0 %v155
    %200 = vmatprep.subr.mxu0 0.0
    %201 = vmatpush1.msra.mxu0 %v156
    %202 = vmatprep.subr.mxu0 0.0
    %203 = vmatpush1.msra.mxu0 %v157
    %204 = vmatprep.subr.mxu0 0.0
    %205 = vmatpush1.msra.mxu0 %v158
    %206 = vmatprep.subr.mxu0 0.0
    %207 = vmatpush1.msra.mxu0 %v159
    %208 = vmatprep.subr.mxu0 0.0
    %209 = vmatpush1.msra.mxu0 %v160
    %210 = vmatprep.subr.mxu0 0.0
    %211 = vmatpush1.msra.mxu0 %v161
    %212 = vmatprep.subr.mxu0 0.0
    %213 = vmatpush1.msra.mxu0 %v162
    %214 = vmatprep.subr.mxu0 0.0
    %215 = vmatpush1.msra.mxu0 %v163
    %216 = vmatprep.subr.mxu0 0.0
    %217 = vmatpush1.msra.mxu0 %v164
    %218 = vmatprep.subr.mxu0 0.0
    %219 = vmatpush1.msra.mxu0 %v165
    %220 = vmatprep.subr.mxu0 0.0
    %221 = vmatpush1.msra.mxu0 %v166
    %222 = vmatprep.subr.mxu0 0.0
    %223 = vmatpush1.msra.mxu0 %v167
    %224 = vmatprep.subr.mxu0 0.0
    %225 = vmatpush1.msra.mxu0 %v168
    %226 = vmatprep.subr.mxu0 0.0
    %227 = vmatpush1.msra.mxu0 %v169
    %228 = vmatprep.subr.mxu0 0.0
    %229 = vmatpush1.msra.mxu0 %v170
    %230 = vmatprep.subr.mxu0 0.0
    %231 = vmatpush1.msra.mxu0 %v171
    %232 = vmatprep.subr.mxu0 0.0
    %233 = vmatpush1.msra.mxu0 %v172
    %234 = vmatprep.subr.mxu0 0.0
    %235 = vmatpush1.msra.mxu0 %v173
    %236 = vmatprep.subr.mxu0 0.0
    %237 = vmatpush1.msra.mxu0 %v174
    %238 = vmatprep.subr.mxu0 0.0
    %239 = vmatpush1.msra.mxu0 %v175
    %240 = vmatprep.subr.mxu0 0.0
    %241 = vmatpush1.msra.mxu0 %v176
    %242 = vmatprep.subr.mxu0 0.0
    %243 = vmatpush1.msra.mxu0 %v177
    %244 = vmatprep.subr.mxu0 0.0
    %245 = vmatpush1.msra.mxu0 %v178
    %246 = vmatprep.subr.mxu0 0.0
    %247 = vmatpush1.msra.mxu0 %v179
    %248 = vmatprep.subr.mxu0 0.0
    %249 = vmatpush1.msra.mxu0 %v180
    %250 = vmatprep.mubr.f32.mxu0 %v86
    %251 = vmatmul.mubr.f32.gmra.mrb[0].mxu0 %v85
    %v252 = vpop.f32.mrb[0].mxu0
    %v253 = vadd.f32 %v185, %v252
    %v254 = vpop.f32.mrb[0].mxu0
    %255 = vmatprep.mubr.f32.mxu0 %v88
    %256 = vmatmul.mubr.f32.gmra.mrb[0].mxu0 %v87
    %v257 = vpop.f32.mrb[0].mxu0
    %v258 = vadd.f32 %v185, %v257
    %v259 = vpop.f32.mrb[0].mxu0
    %260 = vmatprep.mubr.f32.mxu0 %v90
    %261 = vmatmul.mubr.f32.gmra.mrb[0].mxu0 %v89
    %v262 = vpop.f32.mrb[0].mxu0
    %v263 = vadd.f32 %v185, %v262
    %v264 = vpop.f32.mrb[0].mxu0
    %265 = vmatprep.mubr.f32.mxu0 %v92
    %266 = vmatmul.mubr.f32.gmra.mrb[0].mxu0 %v91
    %v267 = vpop.f32.mrb[0].mxu0
    %v268 = vadd.f32 %v185, %v267
    %v269 = vpop.f32.mrb[0].mxu0
    %270 = vmatprep.mubr.f32.mxu0 %v94
    %271 = vmatmul.mubr.f32.gmra.mrb[0].mxu0 %v93
    %v272 = vpop.f32.mrb[0].mxu0
    %v273 = vadd.f32 %v185, %v272
    %v274 = vpop.f32.mrb[0].mxu0
    %275 = vmatprep.mubr.f32.mxu0 %v96
    %276 = vmatmul.mubr.f32.gmra.mrb[0].mxu0 %v95
    %v277 = vpop.f32.mrb[0].mxu0
    %v278 = vadd.f32 %v185, %v277
    %v279 = vpop.f32.mrb[0].mxu0
    %280 = vmatprep.mubr.f32.mxu0 %v98
    %281 = vmatmul.mubr.f32.gmra.mrb[0].mxu0 %v97
    %v282 = vpop.f32.mrb[0].mxu0
    %v283 = vadd.f32 %v185, %v282
    %v284 = vpop.f32.mrb[0].mxu0
    %285 = vmatprep.mubr.f32.mxu0 %v100
    %286 = vmatmul.mubr.f32.gmra.mrb[0].mxu0 %v99
    %v287 = vpop.f32.mrb[0].mxu0
    %v288 = vadd.f32 %v185, %v287
    %v289 = vpop.f32.mrb[0].mxu0
    %290 = vmatprep.mubr.f32.mxu0 %v102
    %291 = vmatmul.mubr.f32.gmra.mrb[0].mxu0 %v101
    %v292 = vpop.f32.mrb[0].mxu0
    %v293 = vadd.f32 %v185, %v292
    %v294 = vpop.f32.mrb[0].mxu0
    %295 = vmatprep.mubr.f32.mxu0 %v104
    %296 = vmatmul.mubr.f32.gmra.mrb[0].mxu0 %v103
    %v297 = vpop.f32.mrb[0].mxu0
    %v298 = vadd.f32 %v185, %v297
    %v299 = vpop.f32.mrb[0].mxu0
    %300 = vmatprep.mubr.f32.mxu0 %v106
    %301 = vmatmul.mubr.f32.gmra.mrb[0].mxu0 %v105
    %v302 = vpop.f32.mrb[0].mxu0
    %v303 = vadd.f32 %v185, %v302
    %v304 = vpop.f32.mrb[0].mxu0
    %305 = vmatprep.mubr.f32.mxu0 %v108
    %306 = vmatmul.mubr.f32.gmra.mrb[0].mxu0 %v107
    %v307 = vpop.f32.mrb[0].mxu0
    %v308 = vadd.f32 %v185, %v307
    %v309 = vpop.f32.mrb[0].mxu0
    %310 = vmatprep.mubr.f32.mxu0 %v110
    %311 = vmatmul.mubr.f32.gmra.mrb[0].mxu0 %v109
    %v312 = vpop.f32.mrb[0].mxu0
    %v313 = vadd.f32 %v185, %v312
    %v314 = vpop.f32.mrb[0].mxu0
    %315 = vmatprep.mubr.f32.mxu0 %v112
    %316 = vmatmul.mubr.f32.gmra.mrb[0].mxu0 %v111
    %v317 = vpop.f32.mrb[0].mxu0
    %v318 = vadd.f32 %v185, %v317
    %v319 = vpop.f32.mrb[0].mxu0
    %320 = vmatprep.mubr.f32.mxu0 %v114
    %321 = vmatmul.mubr.f32.gmra.mrb[0].mxu0 %v113
    %v322 = vpop.f32.mrb[0].mxu0
    %v323 = vadd.f32 %v185, %v322
    %v324 = vpop.f32.mrb[0].mxu0
    %325 = vmatprep.mubr.f32.mxu0 %v116
    %326 = vmatmul.mubr.f32.gmra.mrb[0].mxu0 %v115
    %v327 = vpop.f32.mrb[0].mxu0
    %v328 = vadd.f32 %v185, %v327
    %v329 = vpop.f32.mrb[0].mxu0
    %330 = vmatprep.mubr.f32.mxu0 %v118
    %331 = vmatmul.mubr.f32.gmra.mrb[0].mxu0 %v117
    %v332 = vpop.f32.mrb[0].mxu0
    %v333 = vadd.f32 %v185, %v332
    %v334 = vpop.f32.mrb[0].mxu0
    %335 = vmatprep.mubr.f32.mxu0 %v120
    %336 = vmatmul.mubr.f32.gmra.mrb[0].mxu0 %v119
    %v337 = vpop.f32.mrb[0].mxu0
    %v338 = vadd.f32 %v185, %v337
    %v339 = vpop.f32.mrb[0].mxu0
    %340 = vmatprep.mubr.f32.mxu0 %v122
    %341 = vmatmul.mubr.f32.gmra.mrb[0].mxu0 %v121
    %v342 = vpop.f32.mrb[0].mxu0
    %v343 = vadd.f32 %v185, %v342
    %v344 = vpop.f32.mrb[0].mxu0
    %345 = vmatprep.mubr.f32.mxu0 %v124
    %346 = vmatmul.mubr.f32.gmra.mrb[0].mxu0 %v123
    %v347 = vpop.f32.mrb[0].mxu0
    %v348 = vadd.f32 %v185, %v347
    %v349 = vpop.f32.mrb[0].mxu0
    %350 = vmatprep.mubr.f32.mxu0 %v126
    %351 = vmatmul.mubr.f32.gmra.mrb[0].mxu0 %v125
    %v352 = vpop.f32.mrb[0].mxu0
    %v353 = vadd.f32 %v185, %v352
    %v354 = vpop.f32.mrb[0].mxu0
    %355 = vmatprep.mubr.f32.mxu0 %v128
    %356 = vmatmul.mubr.f32.gmra.mrb[0].mxu0 %v127
    %v357 = vpop.f32.mrb[0].mxu0
    %v358 = vadd.f32 %v185, %v357
    %v359 = vpop.f32.mrb[0].mxu0
    %360 = vmatprep.mubr.f32.mxu0 %v130
    %361 = vmatmul.mubr.f32.gmra.mrb[0].mxu0 %v129
    %v362 = vpop.f32.mrb[0].mxu0
    %v363 = vadd.f32 %v185, %v362
    %v364 = vpop.f32.mrb[0].mxu0
    %365 = vmatprep.mubr.f32.mxu0 %v132
    %366 = vmatmul.mubr.f32.gmra.mrb[0].mxu0 %v131
    %v367 = vpop.f32.mrb[0].mxu0
    %v368 = vadd.f32 %v185, %v367
    %v369 = vpop.f32.mrb[0].mxu0
    %370 = vmatprep.mubr.f32.mxu0 %v134
    %371 = vmatmul.mubr.f32.gmra.mrb[0].mxu0 %v133
    %v372 = vpop.f32.mrb[0].mxu0
    %v373 = vadd.f32 %v185, %v372
    %v374 = vpop.f32.mrb[0].mxu0
    %375 = vmatprep.mubr.f32.mxu0 %v136
    %376 = vmatmul.mubr.f32.gmra.mrb[0].mxu0 %v135
    %v377 = vpop.f32.mrb[0].mxu0
    %v378 = vadd.f32 %v185, %v377
    %v379 = vpop.f32.mrb[0].mxu0
    %380 = vmatprep.mubr.f32.mxu0 %v138
    %381 = vmatmul.mubr.f32.gmra.mrb[0].mxu0 %v137
    %v382 = vpop.f32.mrb[0].mxu0
    %v383 = vadd.f32 %v185, %v382
    %v384 = vpop.f32.mrb[0].mxu0
    %385 = vmatprep.mubr.f32.mxu0 %v140
    %386 = vmatmul.mubr.f32.gmra.mrb[0].mxu0 %v139
    %v387 = vpop.f32.mrb[0].mxu0
    %v388 = vadd.f32 %v185, %v387
    %v389 = vpop.f32.mrb[0].mxu0
    %390 = vmatprep.mubr.f32.mxu0 %v142
    %391 = vmatmul.mubr.f32.gmra.mrb[0].mxu0 %v141
    %v392 = vpop.f32.mrb[0].mxu0
    %v393 = vadd.f32 %v185, %v392
    %v394 = vpop.f32.mrb[0].mxu0
    %395 = vmatprep.mubr.f32.mxu0 %v144
    %396 = vmatmul.mubr.f32.gmra.mrb[0].mxu0 %v143
    %v397 = vpop.f32.mrb[0].mxu0
    %v398 = vadd.f32 %v185, %v397
    %v399 = vpop.f32.mrb[0].mxu0
    %400 = vmatprep.mubr.f32.mxu0 %v146
    %401 = vmatmul.mubr.f32.gmra.mrb[0].mxu0 %v145
    %v402 = vpop.f32.mrb[0].mxu0
    %v403 = vadd.f32 %v185, %v402
    %v404 = vpop.f32.mrb[0].mxu0
    %405 = vmatprep.mubr.f32.mxu0 %v148
    %406 = vmatmul.mubr.f32.gmra.mrb[0].mxu0 %v147
    %v407 = vpop.f32.mrb[0].mxu0
    %v408 = vadd.f32 %v185, %v407
    %v409 = vpop.f32.mrb[0].mxu0
    %410 = vdwg.mxu0
    %411 = vadd.xlane.f32.xlu0 %v253
    %v412 = vpop.xlane.xlu0 %411
    %413 = vadd.xlane.f32.xlu0 %v258
    %v414 = vpop.xlane.xlu0 %413
    %415 = vadd.xlane.f32.xlu0 %v263
    %v416 = vpop.xlane.xlu0 %415
    %417 = vadd.xlane.f32.xlu0 %v268
    %v418 = vpop.xlane.xlu0 %417
    %419 = vadd.xlane.f32.xlu0 %v273
    %v420 = vpop.xlane.xlu0 %419
    %421 = vadd.xlane.f32.xlu0 %v278
    %v422 = vpop.xlane.xlu0 %421
    %423 = vadd.xlane.f32.xlu0 %v283
    %v424 = vpop.xlane.xlu0 %423
    %425 = vadd.xlane.f32.xlu0 %v288
    %v426 = vpop.xlane.xlu0 %425
    %427 = vadd.xlane.f32.xlu0 %v293
    %v428 = vpop.xlane.xlu0 %427
    %429 = vadd.xlane.f32.xlu0 %v298
    %v430 = vpop.xlane.xlu0 %429
    %431 = vadd.xlane.f32.xlu0 %v303
    %v432 = vpop.xlane.xlu0 %431
    %433 = vadd.xlane.f32.xlu0 %v308
    %v434 = vpop.xlane.xlu0 %433
    %435 = vadd.xlane.f32.xlu0 %v313
    %v436 = vpop.xlane.xlu0 %435
    %437 = vadd.xlane.f32.xlu0 %v318
    %v438 = vpop.xlane.xlu0 %437
    %439 = vadd.xlane.f32.xlu0 %v323
    %v440 = vpop.xlane.xlu0 %439
    %441 = vadd.xlane.f32.xlu0 %v328
    %v442 = vpop.xlane.xlu0 %441
    %443 = vadd.xlane.f32.xlu0 %v333
    %v444 = vpop.xlane.xlu0 %443
    %445 = vadd.xlane.f32.xlu0 %v338
    %v446 = vpop.xlane.xlu0 %445
    %447 = vadd.xlane.f32.xlu0 %v343
    %v448 = vpop.xlane.xlu0 %447
    %449 = vadd.xlane.f32.xlu0 %v348
    %v450 = vpop.xlane.xlu0 %449
    %451 = vadd.xlane.f32.xlu0 %v353
    %v452 = vpop.xlane.xlu0 %451
    %453 = vadd.xlane.f32.xlu0 %v358
    %v454 = vpop.xlane.xlu0 %453
    %455 = vadd.xlane.f32.xlu0 %v363
    %v456 = vpop.xlane.xlu0 %455
    %457 = vadd.xlane.f32.xlu0 %v368
    %v458 = vpop.xlane.xlu0 %457
    %459 = vadd.xlane.f32.xlu0 %v373
    %v460 = vpop.xlane.xlu0 %459
    %461 = vadd.xlane.f32.xlu0 %v378
    %v462 = vpop.xlane.xlu0 %461
    %463 = vadd.xlane.f32.xlu0 %v383
    %v464 = vpop.xlane.xlu0 %463
    %465 = vadd.xlane.f32.xlu0 %v388
    %v466 = vpop.xlane.xlu0 %465
    %467 = vadd.xlane.f32.xlu0 %v393
    %v468 = vpop.xlane.xlu0 %467
    %469 = vadd.xlane.f32.xlu0 %v398
    %v470 = vpop.xlane.xlu0 %469
    %471 = vadd.xlane.f32.xlu0 %v403
    %v472 = vpop.xlane.xlu0 %471
    %473 = vadd.xlane.f32.xlu0 %v408
    %v474 = vpop.xlane.xlu0 %473
    %v475 = vrcp.pop 128.0
    %v476 = vmul.f32 %v412, %v475
    %v477 = vmul.f32 %v414, %v475
    %v478 = vmul.f32 %v416, %v475
    %v479 = vmul.f32 %v418, %v475
    %v480 = vmul.f32 %v420, %v475
    %v481 = vmul.f32 %v422, %v475
    %v482 = vmul.f32 %v424, %v475
    %v483 = vmul.f32 %v426, %v475
    %v484 = vmul.f32 %v428, %v475
    %v485 = vmul.f32 %v430, %v475
    %v486 = vmul.f32 %v432, %v475
    %v487 = vmul.f32 %v434, %v475
    %v488 = vmul.f32 %v436, %v475
    %v489 = vmul.f32 %v438, %v475
    %v490 = vmul.f32 %v440, %v475
    %v491 = vmul.f32 %v442, %v475
    %v492 = vmul.f32 %v444, %v475
    %v493 = vmul.f32 %v446, %v475
    %v494 = vmul.f32 %v448, %v475
    %v495 = vmul.f32 %v450, %v475
    %v496 = vmul.f32 %v452, %v475
    %v497 = vmul.f32 %v454, %v475
    %v498 = vmul.f32 %v456, %v475
    %v499 = vmul.f32 %v458, %v475
    %v500 = vmul.f32 %v460, %v475
    %v501 = vmul.f32 %v462, %v475
    %v502 = vmul.f32 %v464, %v475
    %v503 = vmul.f32 %v466, %v475
    %v504 = vmul.f32 %v468, %v475
    %v505 = vmul.f32 %v470, %v475
    %v506 = vmul.f32 %v472, %v475
    %v507 = vmul.f32 %v474, %v475
    %v508 = vsub.f32 %v253, %v476
    %v509 = vsub.f32 %v258, %v477
    %v510 = vsub.f32 %v263, %v478
    %v511 = vsub.f32 %v268, %v479
    %v512 = vsub.f32 %v273, %v480
    %v513 = vsub.f32 %v278, %v481
    %v514 = vsub.f32 %v283, %v482
    %v515 = vsub.f32 %v288, %v483
    %v516 = vsub.f32 %v293, %v484
    %v517 = vsub.f32 %v298, %v485
    %v518 = vsub.f32 %v303, %v486
    %v519 = vsub.f32 %v308, %v487
    %v520 = vsub.f32 %v313, %v488
    %v521 = vsub.f32 %v318, %v489
    %v522 = vsub.f32 %v323, %v490
    %v523 = vsub.f32 %v328, %v491
    %v524 = vsub.f32 %v333, %v492
    %v525 = vsub.f32 %v338, %v493
    %v526 = vsub.f32 %v343, %v494
    %v527 = vsub.f32 %v348, %v495
    %v528 = vsub.f32 %v353, %v496
    %v529 = vsub.f32 %v358, %v497
    %v530 = vsub.f32 %v363, %v498
    %v531 = vsub.f32 %v368, %v499
    %v532 = vsub.f32 %v373, %v500
    %v533 = vsub.f32 %v378, %v501
    %v534 = vsub.f32 %v383, %v502
    %v535 = vsub.f32 %v388, %v503
    %v536 = vsub.f32 %v393, %v504
    %v537 = vsub.f32 %v398, %v505
    %v538 = vsub.f32 %v403, %v506
    %v539 = vsub.f32 %v408, %v507
    %v540 = vmul.f32 %v508, %v508
    %v541 = vmul.f32 %v509, %v509
    %v542 = vmul.f32 %v510, %v510
    %v543 = vmul.f32 %v511, %v511
    %v544 = vmul.f32 %v512, %v512
    %v545 = vmul.f32 %v513, %v513
    %v546 = vmul.f32 %v514, %v514
    %v547 = vmul.f32 %v515, %v515
    %v548 = vmul.f32 %v516, %v516
    %v549 = vmul.f32 %v517, %v517
    %v550 = vmul.f32 %v518, %v518
    %v551 = vmul.f32 %v519, %v519
    %v552 = vmul.f32 %v520, %v520
    %v553 = vmul.f32 %v521, %v521
    %v554 = vmul.f32 %v522, %v522
    %v555 = vmul.f32 %v523, %v523
    %v556 = vmul.f32 %v524, %v524
    %v557 = vmul.f32 %v525, %v525
    %v558 = vmul.f32 %v526, %v526
    %v559 = vmul.f32 %v527, %v527
    %v560 = vmul.f32 %v528, %v528
    %v561 = vmul.f32 %v529, %v529
    %v562 = vmul.f32 %v530, %v530
    %v563 = vmul.f32 %v531, %v531
    %v564 = vmul.f32 %v532, %v532
    %v565 = vmul.f32 %v533, %v533
    %v566 = vmul.f32 %v534, %v534
    %v567 = vmul.f32 %v535, %v535
    %v568 = vmul.f32 %v536, %v536
    %v569 = vmul.f32 %v537, %v537
    %v570 = vmul.f32 %v538, %v538
    %v571 = vmul.f32 %v539, %v539
    %572 = vadd.xlane.f32.xlu0 %v540
    %v573 = vpop.xlane.xlu0 %572
    %574 = vadd.xlane.f32.xlu0 %v541
    %v575 = vpop.xlane.xlu0 %574
    %576 = vadd.xlane.f32.xlu0 %v542
    %v577 = vpop.xlane.xlu0 %576
    %578 = vadd.xlane.f32.xlu0 %v543
    %v579 = vpop.xlane.xlu0 %578
    %580 = vadd.xlane.f32.xlu0 %v544
    %v581 = vpop.xlane.xlu0 %580
    %582 = vadd.xlane.f32.xlu0 %v545
    %v583 = vpop.xlane.xlu0 %582
    %584 = vadd.xlane.f32.xlu0 %v546
    %v585 = vpop.xlane.xlu0 %584
    %586 = vadd.xlane.f32.xlu0 %v547
    %v587 = vpop.xlane.xlu0 %586
    %588 = vadd.xlane.f32.xlu0 %v548
    %v589 = vpop.xlane.xlu0 %588
    %590 = vadd.xlane.f32.xlu0 %v549
    %v591 = vpop.xlane.xlu0 %590
    %592 = vadd.xlane.f32.xlu0 %v550
    %v593 = vpop.xlane.xlu0 %592
    %594 = vadd.xlane.f32.xlu0 %v551
    %v595 = vpop.xlane.xlu0 %594
    %596 = vadd.xlane.f32.xlu0 %v552
    %v597 = vpop.xlane.xlu0 %596
    %598 = vadd.xlane.f32.xlu0 %v553
    %v599 = vpop.xlane.xlu0 %598
    %600 = vadd.xlane.f32.xlu0 %v554
    %v601 = vpop.xlane.xlu0 %600
    %602 = vadd.xlane.f32.xlu0 %v555
    %v603 = vpop.xlane.xlu0 %602
    %604 = vadd.xlane.f32.xlu0 %v556
    %v605 = vpop.xlane.xlu0 %604
    %606 = vadd.xlane.f32.xlu0 %v557
    %v607 = vpop.xlane.xlu0 %606
    %608 = vadd.xlane.f32.xlu0 %v558
    %v609 = vpop.xlane.xlu0 %608
    %610 = vadd.xlane.f32.xlu0 %v559
    %v611 = vpop.xlane.xlu0 %610
    %612 = vadd.xlane.f32.xlu0 %v560
    %v613 = vpop.xlane.xlu0 %612
    %614 = vadd.xlane.f32.xlu0 %v561
    %v615 = vpop.xlane.xlu0 %614
    %616 = vadd.xlane.f32.xlu0 %v562
    %v617 = vpop.xlane.xlu0 %616
    %618 = vadd.xlane.f32.xlu0 %v563
    %v619 = vpop.xlane.xlu0 %618
    %620 = vadd.xlane.f32.xlu0 %v564
    %v621 = vpop.xlane.xlu0 %620
    %622 = vadd.xlane.f32.xlu0 %v565
    %v623 = vpop.xlane.xlu0 %622
    %624 = vadd.xlane.f32.xlu0 %v566
    %v625 = vpop.xlane.xlu0 %624
    %626 = vadd.xlane.f32.xlu0 %v567
    %v627 = vpop.xlane.xlu0 %626
    %628 = vadd.xlane.f32.xlu0 %v568
    %v629 = vpop.xlane.xlu0 %628
    %630 = vadd.xlane.f32.xlu0 %v569
    %v631 = vpop.xlane.xlu0 %630
    %632 = vadd.xlane.f32.xlu0 %v570
    %v633 = vpop.xlane.xlu0 %632
    %634 = vadd.xlane.f32.xlu0 %v571
    %v635 = vpop.xlane.xlu0 %634
    %v636 = vmul.f32 %v573, %v475
    %v637 = vmul.f32 %v575, %v475
    %v638 = vmul.f32 %v577, %v475
    %v639 = vmul.f32 %v579, %v475
    %v640 = vmul.f32 %v581, %v475
    %v641 = vmul.f32 %v583, %v475
    %v642 = vmul.f32 %v585, %v475
    %v643 = vmul.f32 %v587, %v475
    %v644 = vmul.f32 %v589, %v475
    %v645 = vmul.f32 %v591, %v475
    %v646 = vmul.f32 %v593, %v475
    %v647 = vmul.f32 %v595, %v475
    %v648 = vmul.f32 %v597, %v475
    %v649 = vmul.f32 %v599, %v475
    %v650 = vmul.f32 %v601, %v475
    %v651 = vmul.f32 %v603, %v475
    %v652 = vmul.f32 %v605, %v475
    %v653 = vmul.f32 %v607, %v475
    %v654 = vmul.f32 %v609, %v475
    %v655 = vmul.f32 %v611, %v475
    %v656 = vmul.f32 %v613, %v475
    %v657 = vmul.f32 %v615, %v475
    %v658 = vmul.f32 %v617, %v475
    %v659 = vmul.f32 %v619, %v475
    %v660 = vmul.f32 %v621, %v475
    %v661 = vmul.f32 %v623, %v475
    %v662 = vmul.f32 %v625, %v475
    %v663 = vmul.f32 %v627, %v475
    %v664 = vmul.f32 %v629, %v475
    %v665 = vmul.f32 %v631, %v475
    %v666 = vmul.f32 %v633, %v475
    %v667 = vmul.f32 %v635, %v475
    %v668 = vadd.f32 %v636, 1e-05
    %v669 = vadd.f32 %v637, 1e-05
    %v670 = vadd.f32 %v638, 1e-05
    %v671 = vadd.f32 %v639, 1e-05
    %v672 = vadd.f32 %v640, 1e-05
    %v673 = vadd.f32 %v641, 1e-05
    %v674 = vadd.f32 %v642, 1e-05
    %v675 = vadd.f32 %v643, 1e-05
    %v676 = vadd.f32 %v644, 1e-05
    %v677 = vadd.f32 %v645, 1e-05
    %v678 = vadd.f32 %v646, 1e-05
    %v679 = vadd.f32 %v647, 1e-05
    %v680 = vadd.f32 %v648, 1e-05
    %v681 = vadd.f32 %v649, 1e-05
    %v682 = vadd.f32 %v650, 1e-05
    %v683 = vadd.f32 %v651, 1e-05
    %v684 = vadd.f32 %v652, 1e-05
    %v685 = vadd.f32 %v653, 1e-05
    %v686 = vadd.f32 %v654, 1e-05
    %v687 = vadd.f32 %v655, 1e-05
    %v688 = vadd.f32 %v656, 1e-05
    %v689 = vadd.f32 %v657, 1e-05
    %v690 = vadd.f32 %v658, 1e-05
    %v691 = vadd.f32 %v659, 1e-05
    %v692 = vadd.f32 %v660, 1e-05
    %v693 = vadd.f32 %v661, 1e-05
    %v694 = vadd.f32 %v662, 1e-05
    %v695 = vadd.f32 %v663, 1e-05
    %v696 = vadd.f32 %v664, 1e-05
    %v697 = vadd.f32 %v665, 1e-05
    %v698 = vadd.f32 %v666, 1e-05
    %v699 = vadd.f32 %v667, 1e-05
    %v700 = vrsqrt.pop %v668
    %v701 = vrsqrt.pop %v669
    %v702 = vrsqrt.pop %v670
    %v703 = vrsqrt.pop %v671
    %v704 = vrsqrt.pop %v672
    %v705 = vrsqrt.pop %v673
    %v706 = vrsqrt.pop %v674
    %v707 = vrsqrt.pop %v675
    %v708 = vrsqrt.pop %v676
    %v709 = vrsqrt.pop %v677
    %v710 = vrsqrt.pop %v678
    %v711 = vrsqrt.pop %v679
    %v712 = vrsqrt.pop %v680
    %v713 = vrsqrt.pop %v681
    %v714 = vrsqrt.pop %v682
    %v715 = vrsqrt.pop %v683
    %v716 = vrsqrt.pop %v684
    %v717 = vrsqrt.pop %v685
    %v718 = vrsqrt.pop %v686
    %v719 = vrsqrt.pop %v687
    %v720 = vrsqrt.pop %v688
    %v721 = vrsqrt.pop %v689
    %v722 = vrsqrt.pop %v690
    %v723 = vrsqrt.pop %v691
    %v724 = vrsqrt.pop %v692
    %v725 = vrsqrt.pop %v693
    %v726 = vrsqrt.pop %v694
    %v727 = vrsqrt.pop %v695
    %v728 = vrsqrt.pop %v696
    %v729 = vrsqrt.pop %v697
    %v730 = vrsqrt.pop %v698
    %v731 = vrsqrt.pop %v699
    %v732 = vmul.f32 %v508, %v700
    %v733 = vmul.f32 %v509, %v701
    %v734 = vmul.f32 %v510, %v702
    %v735 = vmul.f32 %v511, %v703
    %v736 = vmul.f32 %v512, %v704
    %v737 = vmul.f32 %v513, %v705
    %v738 = vmul.f32 %v514, %v706
    %v739 = vmul.f32 %v515, %v707
    %v740 = vmul.f32 %v516, %v708
    %v741 = vmul.f32 %v517, %v709
    %v742 = vmul.f32 %v518, %v710
    %v743 = vmul.f32 %v519, %v711
    %v744 = vmul.f32 %v520, %v712
    %v745 = vmul.f32 %v521, %v713
    %v746 = vmul.f32 %v522, %v714
    %v747 = vmul.f32 %v523, %v715
    %v748 = vmul.f32 %v524, %v716
    %v749 = vmul.f32 %v525, %v717
    %v750 = vmul.f32 %v526, %v718
    %v751 = vmul.f32 %v527, %v719
    %v752 = vmul.f32 %v528, %v720
    %v753 = vmul.f32 %v529, %v721
    %v754 = vmul.f32 %v530, %v722
    %v755 = vmul.f32 %v531, %v723
    %v756 = vmul.f32 %v532, %v724
    %v757 = vmul.f32 %v533, %v725
    %v758 = vmul.f32 %v534, %v726
    %v759 = vmul.f32 %v535, %v727
    %v760 = vmul.f32 %v536, %v728
    %v761 = vmul.f32 %v537, %v729
    %v762 = vmul.f32 %v538, %v730
    %v763 = vmul.f32 %v539, %v731
    %v764 = vld [vmem:[%s3 + $0x1] sm:$0x1]
    %v765 = vlaneseq
    %v766 = vshrl.u32 %v765, 7
    %v767 = vsub.s32 0, %v766
    %v768 = vrot.slane %v764, %v767
    %v769 = vmul.f32 %v732, %v768
    %v770 = vmul.f32 %v733, %v768
    %v771 = vmul.f32 %v734, %v768
    %v772 = vmul.f32 %v735, %v768
    %v773 = vmul.f32 %v736, %v768
    %v774 = vmul.f32 %v737, %v768
    %v775 = vmul.f32 %v738, %v768
    %v776 = vmul.f32 %v739, %v768
    %v777 = vmul.f32 %v740, %v768
    %v778 = vmul.f32 %v741, %v768
    %v779 = vmul.f32 %v742, %v768
    %v780 = vmul.f32 %v743, %v768
    %v781 = vmul.f32 %v744, %v768
    %v782 = vmul.f32 %v745, %v768
    %v783 = vmul.f32 %v746, %v768
    %v784 = vmul.f32 %v747, %v768
    %v785 = vmul.f32 %v748, %v768
    %v786 = vmul.f32 %v749, %v768
    %v787 = vmul.f32 %v750, %v768
    %v788 = vmul.f32 %v751, %v768
    %v789 = vmul.f32 %v752, %v768
    %v790 = vmul.f32 %v753, %v768
    %v791 = vmul.f32 %v754, %v768
    %v792 = vmul.f32 %v755, %v768
    %v793 = vmul.f32 %v756, %v768
    %v794 = vmul.f32 %v757, %v768
    %v795 = vmul.f32 %v758, %v768
    %v796 = vmul.f32 %v759, %v768
    %v797 = vmul.f32 %v760, %v768
    %v798 = vmul.f32 %v761, %v768
    %v799 = vmul.f32 %v762, %v768
    %v800 = vmul.f32 %v763, %v768
    %v801 = vld [vmem:[%s3 + $0x2] sm:$0x1]
    %v802 = vlaneseq
    %v803 = vshrl.u32 %v802, 7
    %v804 = vsub.s32 0, %v803
    %v805 = vrot.slane %v801, %v804
    %v806 = vadd.f32 %v769, %v805
    %v807 = vadd.f32 %v770, %v805
    %v808 = vadd.f32 %v771, %v805
    %v809 = vadd.f32 %v772, %v805
    %v810 = vadd.f32 %v773, %v805
    %v811 = vadd.f32 %v774, %v805
    %v812 = vadd.f32 %v775, %v805
    %v813 = vadd.f32 %v776, %v805
    %v814 = vadd.f32 %v777, %v805
    %v815 = vadd.f32 %v778, %v805
    %v816 = vadd.f32 %v779, %v805
    %v817 = vadd.f32 %v780, %v805
    %v818 = vadd.f32 %v781, %v805
    %v819 = vadd.f32 %v782, %v805
    %v820 = vadd.f32 %v783, %v805
    %v821 = vadd.f32 %v784, %v805
    %v822 = vadd.f32 %v785, %v805
    %v823 = vadd.f32 %v786, %v805
    %v824 = vadd.f32 %v787, %v805
    %v825 = vadd.f32 %v788, %v805
    %v826 = vadd.f32 %v789, %v805
    %v827 = vadd.f32 %v790, %v805
    %v828 = vadd.f32 %v791, %v805
    %v829 = vadd.f32 %v792, %v805
    %v830 = vadd.f32 %v793, %v805
    %v831 = vadd.f32 %v794, %v805
    %v832 = vadd.f32 %v795, %v805
    %v833 = vadd.f32 %v796, %v805
    %v834 = vadd.f32 %v797, %v805
    %v835 = vadd.f32 %v798, %v805
    %v836 = vadd.f32 %v799, %v805
    %v837 = vadd.f32 %v800, %v805
    %838 = vst [vmem:[#allocation15] sm:$0xff] %v806
    %839 = vst [vmem:[#allocation15 + $0x8] sm:$0xff] %v807
    %840 = vst [vmem:[#allocation15 + $0x10] sm:$0xff] %v808
    %841 = vst [vmem:[#allocation15 + $0x18] sm:$0xff] %v809
    %842 = vst [vmem:[#allocation15 + $0x20] sm:$0xff] %v810
    %843 = vst [vmem:[#allocation15 + $0x28] sm:$0xff] %v811
    %844 = vst [vmem:[#allocation15 + $0x30] sm:$0xff] %v812
    %845 = vst [vmem:[#allocation15 + $0x38] sm:$0xff] %v813
    %846 = vst [vmem:[#allocation15 + $0x40] sm:$0xff] %v814
    %847 = vst [vmem:[#allocation15 + $0x48] sm:$0xff] %v815
    %848 = vst [vmem:[#allocation15 + $0x50] sm:$0xff] %v816
    %849 = vst [vmem:[#allocation15 + $0x58] sm:$0xff] %v817
    %850 = vst [vmem:[#allocation15 + $0x60] sm:$0xff] %v818
    %851 = vst [vmem:[#allocation15 + $0x68] sm:$0xff] %v819
    %852 = vst [vmem:[#allocation15 + $0x70] sm:$0xff] %v820
    %853 = vst [vmem:[#allocation15 + $0x78] sm:$0xff] %v821
    %854 = vst [vmem:[#allocation15 + $0x80] sm:$0xff] %v822
    %855 = vst [vmem:[#allocation15 + $0x88] sm:$0xff] %v823
    %856 = vst [vmem:[#allocation15 + $0x90] sm:$0xff] %v824
    %857 = vst [vmem:[#allocation15 + $0x98] sm:$0xff] %v825
    %858 = vst [vmem:[#allocation15 + $0xa0] sm:$0xff] %v826
    %859 = vst [vmem:[#allocation15 + $0xa8] sm:$0xff] %v827
    %860 = vst [vmem:[#allocation15 + $0xb0] sm:$0xff] %v828
    %861 = vst [vmem:[#allocation15 + $0xb8] sm:$0xff] %v829
    %862 = vst [vmem:[#allocation15 + $0xc0] sm:$0xff] %v830
    %863 = vst [vmem:[#allocation15 + $0xc8] sm:$0xff] %v831
    %864 = vst [vmem:[#allocation15 + $0xd0] sm:$0xff] %v832
    %865 = vst [vmem:[#allocation15 + $0xd8] sm:$0xff] %v833
    %866 = vst [vmem:[#allocation15 + $0xe0] sm:$0xff] %v834
    %867 = vst [vmem:[#allocation15 + $0xe8] sm:$0xff] %v835
    %868 = vst [vmem:[#allocation15 + $0xf0] sm:$0xff] %v836
    %869 = vst [vmem:[#allocation15 + $0xf8] sm:$0xff] %v837
    %v870 = vld [vmem:[#allocation9] sm:$0xff]
    %v871 = vld [vmem:[#allocation9 + $0x8] sm:$0xff]
    %v872 = vld [vmem:[#allocation9 + $0x10] sm:$0xff]
    %v873 = vld [vmem:[#allocation9 + $0x18] sm:$0xff]
    %v874 = vld [vmem:[#allocation9 + $0x20] sm:$0xff]
    %v875 = vld [vmem:[#allocation9 + $0x28] sm:$0xff]
    %v876 = vld [vmem:[#allocation9 + $0x30] sm:$0xff]
    %v877 = vld [vmem:[#allocation9 + $0x38] sm:$0xff]
    %v878 = vld [vmem:[#allocation9 + $0x40] sm:$0xff]
    %v879 = vld [vmem:[#allocation9 + $0x48] sm:$0xff]
    %v880 = vld [vmem:[#allocation9 + $0x50] sm:$0xff]
    %v881 = vld [vmem:[#allocation9 + $0x58] sm:$0xff]
    %v882 = vld [vmem:[#allocation9 + $0x60] sm:$0xff]
    %v883 = vld [vmem:[#allocation9 + $0x68] sm:$0xff]
    %v884 = vld [vmem:[#allocation9 + $0x70] sm:$0xff]
    %v885 = vld [vmem:[#allocation9 + $0x78] sm:$0xff]
    %v886 = vld [vmem:[#allocation9 + $0x80] sm:$0xff]
    %v887 = vld [vmem:[#allocation9 + $0x88] sm:$0xff]
    %v888 = vld [vmem:[#allocation9 + $0x90] sm:$0xff]
    %v889 = vld [vmem:[#allocation9 + $0x98] sm:$0xff]
    %v890 = vld [vmem:[#allocation9 + $0xa0] sm:$0xff]
    %v891 = vld [vmem:[#allocation9 + $0xa8] sm:$0xff]
    %v892 = vld [vmem:[#allocation9 + $0xb0] sm:$0xff]
    %v893 = vld [vmem:[#allocation9 + $0xb8] sm:$0xff]
    %v894 = vld [vmem:[#allocation9 + $0xc0] sm:$0xff]
    %v895 = vld [vmem:[#allocation9 + $0xc8] sm:$0xff]
    %v896 = vld [vmem:[#allocation9 + $0xd0] sm:$0xff]
    %v897 = vld [vmem:[#allocation9 + $0xd8] sm:$0xff]
    %v898 = vld [vmem:[#allocation9 + $0xe0] sm:$0xff]
    %v899 = vld [vmem:[#allocation9 + $0xe8] sm:$0xff]
    %v900 = vld [vmem:[#allocation9 + $0xf0] sm:$0xff]
    %v901 = vld [vmem:[#allocation9 + $0xf8] sm:$0xff]
    %v902 = vld [vmem:[#allocation9 + $0x100] sm:$0xff]
    %v903 = vld [vmem:[#allocation9 + $0x108] sm:$0xff]
    %v904 = vld [vmem:[#allocation9 + $0x110] sm:$0xff]
    %v905 = vld [vmem:[#allocation9 + $0x118] sm:$0xff]
    %v906 = vld [vmem:[#allocation9 + $0x120] sm:$0xff]
    %v907 = vld [vmem:[#allocation9 + $0x128] sm:$0xff]
    %v908 = vld [vmem:[#allocation9 + $0x130] sm:$0xff]
    %v909 = vld [vmem:[#allocation9 + $0x138] sm:$0xff]
    %v910 = vld [vmem:[#allocation9 + $0x140] sm:$0xff]
    %v911 = vld [vmem:[#allocation9 + $0x148] sm:$0xff]
    %v912 = vld [vmem:[#allocation9 + $0x150] sm:$0xff]
    %v913 = vld [vmem:[#allocation9 + $0x158] sm:$0xff]
    %v914 = vld [vmem:[#allocation9 + $0x160] sm:$0xff]
    %v915 = vld [vmem:[#allocation9 + $0x168] sm:$0xff]
    %v916 = vld [vmem:[#allocation9 + $0x170] sm:$0xff]
    %v917 = vld [vmem:[#allocation9 + $0x178] sm:$0xff]
    %v918 = vld [vmem:[#allocation9 + $0x180] sm:$0xff]
    %v919 = vld [vmem:[#allocation9 + $0x188] sm:$0xff]
    %v920 = vld [vmem:[#allocation9 + $0x190] sm:$0xff]
    %v921 = vld [vmem:[#allocation9 + $0x198] sm:$0xff]
    %v922 = vld [vmem:[#allocation9 + $0x1a0] sm:$0xff]
    %v923 = vld [vmem:[#allocation9 + $0x1a8] sm:$0xff]
    %v924 = vld [vmem:[#allocation9 + $0x1b0] sm:$0xff]
    %v925 = vld [vmem:[#allocation9 + $0x1b8] sm:$0xff]
    %v926 = vld [vmem:[#allocation9 + $0x1c0] sm:$0xff]
    %v927 = vld [vmem:[#allocation9 + $0x1c8] sm:$0xff]
    %v928 = vld [vmem:[#allocation9 + $0x1d0] sm:$0xff]
    %v929 = vld [vmem:[#allocation9 + $0x1d8] sm:$0xff]
    %v930 = vld [vmem:[#allocation9 + $0x1e0] sm:$0xff]
    %v931 = vld [vmem:[#allocation9 + $0x1e8] sm:$0xff]
    %v932 = vld [vmem:[#allocation9 + $0x1f0] sm:$0xff]
    %v933 = vld [vmem:[#allocation9 + $0x1f8] sm:$0xff]
    %v934 = vld [vmem:[#allocation10] sm:$0xff]
    %v935 = vld [vmem:[#allocation10 + $0x8] sm:$0xff]
    %v936 = vld [vmem:[#allocation10 + $0x10] sm:$0xff]
    %v937 = vld [vmem:[#allocation10 + $0x18] sm:$0xff]
    %v938 = vld [vmem:[#allocation10 + $0x20] sm:$0xff]
    %v939 = vld [vmem:[#allocation10 + $0x28] sm:$0xff]
    %v940 = vld [vmem:[#allocation10 + $0x30] sm:$0xff]
    %v941 = vld [vmem:[#allocation10 + $0x38] sm:$0xff]
    %v942 = vld [vmem:[#allocation10 + $0x40] sm:$0xff]
    %v943 = vld [vmem:[#allocation10 + $0x48] sm:$0xff]
    %v944 = vld [vmem:[#allocation10 + $0x50] sm:$0xff]
    %v945 = vld [vmem:[#allocation10 + $0x58] sm:$0xff]
    %v946 = vld [vmem:[#allocation10 + $0x60] sm:$0xff]
    %v947 = vld [vmem:[#allocation10 + $0x68] sm:$0xff]
    %v948 = vld [vmem:[#allocation10 + $0x70] sm:$0xff]
    %v949 = vld [vmem:[#allocation10 + $0x78] sm:$0xff]
    %v950 = vld [vmem:[#allocation10 + $0x80] sm:$0xff]
    %v951 = vld [vmem:[#allocation10 + $0x88] sm:$0xff]
    %v952 = vld [vmem:[#allocation10 + $0x90] sm:$0xff]
    %v953 = vld [vmem:[#allocation10 + $0x98] sm:$0xff]
    %v954 = vld [vmem:[#allocation10 + $0xa0] sm:$0xff]
    %v955 = vld [vmem:[#allocation10 + $0xa8] sm:$0xff]
    %v956 = vld [vmem:[#allocation10 + $0xb0] sm:$0xff]
    %v957 = vld [vmem:[#allocation10 + $0xb8] sm:$0xff]
    %v958 = vld [vmem:[#allocation10 + $0xc0] sm:$0xff]
    %v959 = vld [vmem:[#allocation10 + $0xc8] sm:$0xff]
    %v960 = vld [vmem:[#allocation10 + $0xd0] sm:$0xff]
    %v961 = vld [vmem:[#allocation10 + $0xd8] sm:$0xff]
    %v962 = vld [vmem:[#allocation10 + $0xe0] sm:$0xff]
    %v963 = vld [vmem:[#allocation10 + $0xe8] sm:$0xff]
    %v964 = vld [vmem:[#allocation10 + $0xf0] sm:$0xff]
    %v965 = vld [vmem:[#allocation10 + $0xf8] sm:$0xff]
    %966 = vmatprep.subr.mxu0 0.0
    %967 = vmatpush1.msra.mxu0 %v934
    %968 = vmatprep.subr.mxu0 0.0
    %969 = vmatpush1.msra.mxu0 %v935
    %970 = vmatprep.subr.mxu0 0.0
    %971 = vmatpush1.msra.mxu0 %v936
    %972 = vmatprep.subr.mxu0 0.0
    %973 = vmatpush1.msra.mxu0 %v937
    %974 = vmatprep.subr.mxu0 0.0
    %975 = vmatpush1.msra.mxu0 %v938
    %976 = vmatprep.subr.mxu0 0.0
    %977 = vmatpush1.msra.mxu0 %v939
    %978 = vmatprep.subr.mxu0 0.0
    %979 = vmatpush1.msra.mxu0 %v940
    %980 = vmatprep.subr.mxu0 0.0
    %981 = vmatpush1.msra.mxu0 %v941
    %982 = vmatprep.subr.mxu0 0.0
    %983 = vmatpush1.msra.mxu0 %v942
    %984 = vmatprep.subr.mxu0 0.0
    %985 = vmatpush1.msra.mxu0 %v943
    %986 = vmatprep.subr.mxu0 0.0
    %987 = vmatpush1.msra.mxu0 %v944
    %988 = vmatprep.subr.mxu0 0.0
    %989 = vmatpush1.msra.mxu0 %v945
    %990 = vmatprep.subr.mxu0 0.0
    %991 = vmatpush1.msra.mxu0 %v946
    %992 = vmatprep.subr.mxu0 0.0
    %993 = vmatpush1.msra.mxu0 %v947
    %994 = vmatprep.subr.mxu0 0.0
    %995 = vmatpush1.msra.mxu0 %v948
    %996 = vmatprep.subr.mxu0 0.0
    %997 = vmatpush1.msra.mxu0 %v949
    %998 = vmatprep.subr.mxu0 0.0
    %999 = vmatpush1.msra.mxu0 %v950
    %1000 = vmatprep.subr.mxu0 0.0
    %1001 = vmatpush1.msra.mxu0 %v951
    %1002 = vmatprep.subr.mxu0 0.0
    %1003 = vmatpush1.msra.mxu0 %v952
    %1004 = vmatprep.subr.mxu0 0.0
    %1005 = vmatpush1.msra.mxu0 %v953
    %1006 = vmatprep.subr.mxu0 0.0
    %1007 = vmatpush1.msra.mxu0 %v954
    %1008 = vmatprep.subr.mxu0 0.0
    %1009 = vmatpush1.msra.mxu0 %v955
    %1010 = vmatprep.subr.mxu0 0.0
    %1011 = vmatpush1.msra.mxu0 %v956
    %1012 = vmatprep.subr.mxu0 0.0
    %1013 = vmatpush1.msra.mxu0 %v957
    %1014 = vmatprep.subr.mxu0 0.0
    %1015 = vmatpush1.msra.mxu0 %v958
    %1016 = vmatprep.subr.mxu0 0.0
    %1017 = vmatpush1.msra.mxu0 %v959
    %1018 = vmatprep.subr.mxu0 0.0
    %1019 = vmatpush1.msra.mxu0 %v960
    %1020 = vmatprep.subr.mxu0 0.0
    %1021 = vmatpush1.msra.mxu0 %v961
    %1022 = vmatprep.subr.mxu0 0.0
    %1023 = vmatpush1.msra.mxu0 %v962
    %1024 = vmatprep.subr.mxu0 0.0
    %1025 = vmatpush1.msra.mxu0 %v963
    %1026 = vmatprep.subr.mxu0 0.0
    %1027 = vmatpush1.msra.mxu0 %v964
    %1028 = vmatprep.subr.mxu0 0.0
    %1029 = vmatpush1.msra.mxu0 %v965
    %1030 = vmatprep.mubr.f32.mxu0 %v871
    %1031 = vmatmul.mubr.f32.gmra.mrb[0].mxu0 %v870
    %v1032 = vpop.f32.mrb[0].mxu0
    %v1033 = vadd.f32 0.0, %v1032
    %v1034 = vpop.f32.mrb[0].mxu0
    %1035 = vmatprep.mubr.f32.mxu0 %v873
    %1036 = vmatmul.mubr.f32.gmra.mrb[0].mxu0 %v872
    %v1037 = vpop.f32.mrb[0].mxu0
    %v1038 = vadd.f32 0.0, %v1037
    %v1039 = vpop.f32.mrb[0].mxu0
    %1040 = vmatprep.mubr.f32.mxu0 %v875
    %1041 = vmatmul.mubr.f32.gmra.mrb[0].mxu0 %v874
    %v1042 = vpop.f32.mrb[0].mxu0
    %v1043 = vadd.f32 0.0, %v1042
    %v1044 = vpop.f32.mrb[0].mxu0
    %1045 = vmatprep.mubr.f32.mxu0 %v877
    %1046 = vmatmul.mubr.f32.gmra.mrb[0].mxu0 %v876
    %v1047 = vpop.f32.mrb[0].mxu0
    %v1048 = vadd.f32 0.0, %v1047
    %v1049 = vpop.f32.mrb[0].mxu0
    %1050 = vmatprep.mubr.f32.mxu0 %v879
    %1051 = vmatmul.mubr.f32.gmra.mrb[0].mxu0 %v878
    %v1052 = vpop.f32.mrb[0].mxu0
    %v1053 = vadd.f32 0.0, %v1052
    %v1054 = vpop.f32.mrb[0].mxu0
    %1055 = vmatprep.mubr.f32.mxu0 %v881
    %1056 = vmatmul.mubr.f32.gmra.mrb[0].mxu0 %v880
    %v1057 = vpop.f32.mrb[0].mxu0
    %v1058 = vadd.f32 0.0, %v1057
    %v1059 = vpop.f32.mrb[0].mxu0
    %1060 = vmatprep.mubr.f32.mxu0 %v883
    %1061 = vmatmul.mubr.f32.gmra.mrb[0].mxu0 %v882
    %v1062 = vpop.f32.mrb[0].mxu0
    %v1063 = vadd.f32 0.0, %v1062
    %v1064 = vpop.f32.mrb[0].mxu0
    %1065 = vmatprep.mubr.f32.mxu0 %v885
    %1066 = vmatmul.mubr.f32.gmra.mrb[0].mxu0 %v884
    %v1067 = vpop.f32.mrb[0].mxu0
    %v1068 = vadd.f32 0.0, %v1067
    %v1069 = vpop.f32.mrb[0].mxu0
    %1070 = vmatprep.mubr.f32.mxu0 %v887
    %1071 = vmatmul.mubr.f32.gmra.mrb[0].mxu0 %v886
    %v1072 = vpop.f32.mrb[0].mxu0
    %v1073 = vadd.f32 0.0, %v1072
    %v1074 = vpop.f32.mrb[0].mxu0
    %1075 = vmatprep.mubr.f32.mxu0 %v889
    %1076 = vmatmul.mubr.f32.gmra.mrb[0].mxu0 %v888
    %v1077 = vpop.f32.mrb[0].mxu0
    %v1078 = vadd.f32 0.0, %v1077
    %v1079 = vpop.f32.mrb[0].mxu0
    %1080 = vmatprep.mubr.f32.mxu0 %v891
    %1081 = vmatmul.mubr.f32.gmra.mrb[0].mxu0 %v890
    %v1082 = vpop.f32.mrb[0].mxu0
    %v1083 = vadd.f32 0.0, %v1082
    %v1084 = vpop.f32.mrb[0].mxu0
    %1085 = vmatprep.mubr.f32.mxu0 %v893
    %1086 = vmatmul.mubr.f32.gmra.mrb[0].mxu0 %v892
    %v1087 = vpop.f32.mrb[0].mxu0
    %v1088 = vadd.f32 0.0, %v1087
    %v1089 = vpop.f32.mrb[0].mxu0
    %1090 = vmatprep.mubr.f32.mxu0 %v895
    %1091 = vmatmul.mubr.f32.gmra.mrb[0].mxu0 %v894
    %v1092 = vpop.f32.mrb[0].mxu0
    %v1093 = vadd.f32 0.0, %v1092
    %v1094 = vpop.f32.mrb[0].mxu0
    %1095 = vmatprep.mubr.f32.mxu0 %v897
    %1096 = vmatmul.mubr.f32.gmra.mrb[0].mxu0 %v896
    %v1097 = vpop.f32.mrb[0].mxu0
    %v1098 = vadd.f32 0.0, %v1097
    %v1099 = vpop.f32.mrb[0].mxu0
    %1100 = vmatprep.mubr.f32.mxu0 %v899
    %1101 = vmatmul.mubr.f32.gmra.mrb[0].mxu0 %v898
    %v1102 = vpop.f32.mrb[0].mxu0
    %v1103 = vadd.f32 0.0, %v1102
    %v1104 = vpop.f32.mrb[0].mxu0
    %1105 = vmatprep.mubr.f32.mxu0 %v901
    %1106 = vmatmul.mubr.f32.gmra.mrb[0].mxu0 %v900
    %v1107 = vpop.f32.mrb[0].mxu0
    %v1108 = vadd.f32 0.0, %v1107
    %v1109 = vpop.f32.mrb[0].mxu0
    %1110 = vmatprep.mubr.f32.mxu0 %v903
    %1111 = vmatmul.mubr.f32.gmra.mrb[0].mxu0 %v902
    %v1112 = vpop.f32.mrb[0].mxu0
    %v1113 = vadd.f32 0.0, %v1112
    %v1114 = vpop.f32.mrb[0].mxu0
    %1115 = vmatprep.mubr.f32.mxu0 %v905
    %1116 = vmatmul.mubr.f32.gmra.mrb[0].mxu0 %v904
    %v1117 = vpop.f32.mrb[0].mxu0
    %v1118 = vadd.f32 0.0, %v1117
    %v1119 = vpop.f32.mrb[0].mxu0
    %1120 = vmatprep.mubr.f32.mxu0 %v907
    %1121 = vmatmul.mubr.f32.gmra.mrb[0].mxu0 %v906
    %v1122 = vpop.f32.mrb[0].mxu0
    %v1123 = vadd.f32 0.0, %v1122
    %v1124 = vpop.f32.mrb[0].mxu0
    %1125 = vmatprep.mubr.f32.mxu0 %v909
    %1126 = vmatmul.mubr.f32.gmra.mrb[0].mxu0 %v908
    %v1127 = vpop.f32.mrb[0].mxu0
    %v1128 = vadd.f32 0.0, %v1127
    %v1129 = vpop.f32.mrb[0].mxu0
    %1130 = vmatprep.mubr.f32.mxu0 %v911
    %1131 = vmatmul.mubr.f32.gmra.mrb[0].mxu0 %v910
    %v1132 = vpop.f32.mrb[0].mxu0
    %v1133 = vadd.f32 0.0, %v1132
    %v1134 = vpop.f32.mrb[0].mxu0
    %1135 = vmatprep.mubr.f32.mxu0 %v913
    %1136 = vmatmul.mubr.f32.gmra.mrb[0].mxu0 %v912
    %v1137 = vpop.f32.mrb[0].mxu0
    %v1138 = vadd.f32 0.0, %v1137
    %v1139 = vpop.f32.mrb[0].mxu0
    %1140 = vmatprep.mubr.f32.mxu0 %v915
    %1141 = vmatmul.mubr.f32.gmra.mrb[0].mxu0 %v914
    %v1142 = vpop.f32.mrb[0].mxu0
    %v1143 = vadd.f32 0.0, %v1142
    %v1144 = vpop.f32.mrb[0].mxu0
    %1145 = vmatprep.mubr.f32.mxu0 %v917
    %1146 = vmatmul.mubr.f32.gmra.mrb[0].mxu0 %v916
    %v1147 = vpop.f32.mrb[0].mxu0
    %v1148 = vadd.f32 0.0, %v1147
    %v1149 = vpop.f32.mrb[0].mxu0
    %1150 = vmatprep.mubr.f32.mxu0 %v919
    %1151 = vmatmul.mubr.f32.gmra.mrb[0].mxu0 %v918
    %v1152 = vpop.f32.mrb[0].mxu0
    %v1153 = vadd.f32 0.0, %v1152
    %v1154 = vpop.f32.mrb[0].mxu0
    %1155 = vmatprep.mubr.f32.mxu0 %v921
    %1156 = vmatmul.mubr.f32.gmra.mrb[0].mxu0 %v920
    %v1157 = vpop.f32.mrb[0].mxu0
    %v1158 = vadd.f32 0.0, %v1157
    %v1159 = vpop.f32.mrb[0].mxu0
    %1160 = vmatprep.mubr.f32.mxu0 %v923
    %1161 = vmatmul.mubr.f32.gmra.mrb[0].mxu0 %v922
    %v1162 = vpop.f32.mrb[0].mxu0
    %v1163 = vadd.f32 0.0, %v1162
    %v1164 = vpop.f32.mrb[0].mxu0
    %1165 = vmatprep.mubr.f32.mxu0 %v925
    %1166 = vmatmul.mubr.f32.gmra.mrb[0].mxu0 %v924
    %v1167 = vpop.f32.mrb[0].mxu0
    %v1168 = vadd.f32 0.0, %v1167
    %v1169 = vpop.f32.mrb[0].mxu0
    %1170 = vmatprep.mubr.f32.mxu0 %v927
    %1171 = vmatmul.mubr.f32.gmra.mrb[0].mxu0 %v926
    %v1172 = vpop.f32.mrb[0].mxu0
    %v1173 = vadd.f32 0.0, %v1172
    %v1174 = vpop.f32.mrb[0].mxu0
    %1175 = vmatprep.mubr.f32.mxu0 %v929
    %1176 = vmatmul.mubr.f32.gmra.mrb[0].mxu0 %v928
    %v1177 = vpop.f32.mrb[0].mxu0
    %v1178 = vadd.f32 0.0, %v1177
    %v1179 = vpop.f32.mrb[0].mxu0
    %1180 = vmatprep.mubr.f32.mxu0 %v931
    %1181 = vmatmul.mubr.f32.gmra.mrb[0].mxu0 %v930
    %v1182 = vpop.f32.mrb[0].mxu0
    %v1183 = vadd.f32 0.0, %v1182
    %v1184 = vpop.f32.mrb[0].mxu0
    %1185 = vmatprep.mubr.f32.mxu0 %v933
    %1186 = vmatmul.mubr.f32.gmra.mrb[0].mxu0 %v932
    %v1187 = vpop.f32.mrb[0].mxu0
    %v1188 = vadd.f32 0.0, %v1187
    %v1189 = vpop.f32.mrb[0].mxu0
    %1190 = vdwg.mxu0
    %1191 = vst [vmem:[#allocation13] sm:$0xff] %v1033
    %1192 = vst [vmem:[#allocation13 + $0x8] sm:$0xff] %v1038
    %1193 = vst [vmem:[#allocation13 + $0x10] sm:$0xff] %v1043
    %1194 = vst [vmem:[#allocation13 + $0x18] sm:$0xff] %v1048
    %1195 = vst [vmem:[#allocation13 + $0x20] sm:$0xff] %v1053
    %1196 = vst [vmem:[#allocation13 + $0x28] sm:$0xff] %v1058
    %1197 = vst [vmem:[#allocation13 + $0x30] sm:$0xff] %v1063
    %1198 = vst [vmem:[#allocation13 + $0x38] sm:$0xff] %v1068
    %1199 = vst [vmem:[#allocation13 + $0x40] sm:$0xff] %v1073
    %1200 = vst [vmem:[#allocation13 + $0x48] sm:$0xff] %v1078
    %1201 = vst [vmem:[#allocation13 + $0x50] sm:$0xff] %v1083
    %1202 = vst [vmem:[#allocation13 + $0x58] sm:$0xff] %v1088
    %1203 = vst [vmem:[#allocation13 + $0x60] sm:$0xff] %v1093
    %1204 = vst [vmem:[#allocation13 + $0x68] sm:$0xff] %v1098
    %1205 = vst [vmem:[#allocation13 + $0x70] sm:$0xff] %v1103
    %1206 = vst [vmem:[#allocation13 + $0x78] sm:$0xff] %v1108
    %1207 = vst [vmem:[#allocation13 + $0x80] sm:$0xff] %v1113
    %1208 = vst [vmem:[#allocation13 + $0x88] sm:$0xff] %v1118
    %1209 = vst [vmem:[#allocation13 + $0x90] sm:$0xff] %v1123
    %1210 = vst [vmem:[#allocation13 + $0x98] sm:$0xff] %v1128
    %1211 = vst [vmem:[#allocation13 + $0xa0] sm:$0xff] %v1133
    %1212 = vst [vmem:[#allocation13 + $0xa8] sm:$0xff] %v1138
    %1213 = vst [vmem:[#allocation13 + $0xb0] sm:$0xff] %v1143
    %1214 = vst [vmem:[#allocation13 + $0xb8] sm:$0xff] %v1148
    %1215 = vst [vmem:[#allocation13 + $0xc0] sm:$0xff] %v1153
    %1216 = vst [vmem:[#allocation13 + $0xc8] sm:$0xff] %v1158
    %1217 = vst [vmem:[#allocation13 + $0xd0] sm:$0xff] %v1163
    %1218 = vst [vmem:[#allocation13 + $0xd8] sm:$0xff] %v1168
    %1219 = vst [vmem:[#allocation13 + $0xe0] sm:$0xff] %v1173
    %1220 = vst [vmem:[#allocation13 + $0xe8] sm:$0xff] %v1178
    %1221 = vst [vmem:[#allocation13 + $0xf0] sm:$0xff] %v1183
    %1222 = vst [vmem:[#allocation13 + $0xf8] sm:$0xff] %v1188
    %s1223 = sld [smem:[#allocation3]]
    %s1224 = scalar_lea.vmem [#allocation10], %s1223
    %v1225 = vld [vmem:[%s1224] sm:$0x1]
    %s1226 = sld [smem:[#allocation3 + $0x1]]
    %s1227 = scalar_lea.vmem [#allocation10], %s1226
    %v1228 = vld [vmem:[%s1227] sm:$0x1]
    %s1229 = sld [smem:[#allocation3 + $0x2]]
    %s1230 = scalar_lea.vmem [#allocation10], %s1229
    %v1231 = vld [vmem:[%s1230] sm:$0x1]
    %s1232 = sld [smem:[#allocation3 + $0x3]]
    %s1233 = scalar_lea.vmem [#allocation10], %s1232
    %v1234 = vld [vmem:[%s1233] sm:$0x1]
    %s1235 = sld [smem:[#allocation3 + $0x4]]
    %s1236 = scalar_lea.vmem [#allocation10], %s1235
    %v1237 = vld [vmem:[%s1236] sm:$0x1]
    %s1238 = sld [smem:[#allocation3 + $0x5]]
    %s1239 = scalar_lea.vmem [#allocation10], %s1238
    %v1240 = vld [vmem:[%s1239] sm:$0x1]
    %s1241 = sld [smem:[#allocation3 + $0x6]]
    %s1242 = scalar_lea.vmem [#allocation10], %s1241
    %v1243 = vld [vmem:[%s1242] sm:$0x1]
    %s1244 = sld [smem:[#allocation3 + $0x7]]
    %s1245 = scalar_lea.vmem [#allocation10], %s1244
    %v1246 = vld [vmem:[%s1245] sm:$0x1]
    %v1248 = vrot.slane %v1228, 7
    %v1251 = vrot.slane %v1231, 6
    %v1254 = vrot.slane %v1234, 5
    %v1257 = vrot.slane %v1237, 4
    %v1260 = vrot.slane %v1240, 3
    %v1263 = vrot.slane %v1243, 2
    %v1266 = vrot.slane %v1246, 1
    %vm1268 = vcmask 1040384
    %v1269 = vsel %vm1268, %v1225, %v1248
    %vm1270 = vcmask 1041408
    %v1271 = vsel %vm1270, %v1269, %v1251
    %vm1272 = vcmask 1042432
    %v1273 = vsel %vm1272, %v1271, %v1254
    %vm1274 = vcmask 1043456
    %v1275 = vsel %vm1274, %v1273, %v1257
    %vm1276 = vcmask 1044480
    %v1277 = vsel %vm1276, %v1275, %v1260
    %vm1278 = vcmask 1045504
    %v1279 = vsel %vm1278, %v1277, %v1263
    %vm1280 = vcmask 1046528
    %v1281 = vsel %vm1280, %v1279, %v1266
    %1282 = vst [vmem:[#allocation12] sm:$0xff] %v1281
    // Predicated region
    $region38: #{tpu_custom_call.1} parent=1 // pred_check
      _
    $region39: #{tpu_custom_call.1} parent=1 // pred_check_branch
      %1284 = sbr.rel (0) target = $region41
    $region40: #{tpu_custom_call.1} parent=1 // pred_region
      %s1286 = ssub.s32 128, 128
      %1287 = vsyncadd [#allocation6], %s1286
      %s1289 = sshll.u32 [#allocation12], 4
      %s1290 = int_to_ptr.vmem [resolvable:$true] %s1289
      %1292 = dma.vmem_to_hbm [thread:$0]  %s1290, 128, %s6, [#allocation6]
    $region41: #{tpu_custom_call.1} parent=1 // pred_fallthru
      _
    // Predicated region
    $region42: #{tpu_custom_call.1} parent=1 // pred_check
      _
    $region43: #{tpu_custom_call.1} parent=1 // pred_check_branch
      %1294 = sbr.rel (0) target = $region45
    $region44: #{tpu_custom_call.1} parent=1 // pred_region
      %s1296 = ssub.s32 4096, 4096
      %1297 = vsyncadd [#allocation14], %s1296
      %s1298 = sshll.u32 [#allocation13], 4
      %s1299 = int_to_ptr.vmem [resolvable:$true] %s1298
      %1304 = dma.vmem_to_hbm [thread:$0]  %s1299, 4096, %s7, [#allocation14], 128, 128, 8
    $region45: #{tpu_custom_call.1} parent=1 // pred_fallthru
      _
    // Predicated region
    $region46: #{tpu_custom_call.1} parent=1 // pred_check
      _
    $region47: #{tpu_custom_call.1} parent=1 // pred_check_branch
      %1306 = sbr.rel (0) target = $region49
    $region48: #{tpu_custom_call.1} parent=1 // pred_region
      %s1308 = ssub.s32 4096, 4096
      %1309 = vsyncadd [#allocation14], %s1308
      %s1310 = sshll.u32 [#allocation15], 4
      %s1311 = int_to_ptr.vmem [resolvable:$true] %s1310
      %1316 = dma.vmem_to_hbm [thread:$0]  %s1311, 4096, %s8, [#allocation14], 128, 128, 8
    $region49: #{tpu_custom_call.1} parent=1 // pred_fallthru
      _
    // Predicated region
    $region50: #{tpu_custom_call.1} parent=1 // pred_check
      _
    $region51: #{tpu_custom_call.1} parent=1 // pred_check_branch
      %1318 = sbr.rel (0) target = $region53
    $region52: #{tpu_custom_call.1} parent=1 // pred_region
      %1319 = dma.done [#allocation6], 128
    $region53: #{tpu_custom_call.1} parent=1 // pred_fallthru
      _
    // Predicated region
    $region54: #{tpu_custom_call.1} parent=1 // pred_check
      _
    $region55: #{tpu_custom_call.1} parent=1 // pred_check_branch
      %1321 = sbr.rel (0) target = $region57
    $region56: #{tpu_custom_call.1} parent=1 // pred_region
      %1322 = dma.done [#allocation14], 4096
    $region57: #{tpu_custom_call.1} parent=1 // pred_fallthru
      _
    // Predicated region
    $region58: #{tpu_custom_call.1} parent=1 // pred_check
      _
    $region59: #{tpu_custom_call.1} parent=1 // pred_check_branch
      %1324 = sbr.rel (0) target = $region61
    $region60: #{tpu_custom_call.1} parent=1 // pred_region
      %1325 = dma.done [#allocation14], 4096
    $region61: #{tpu_custom_call.1} parent=1 // pred_fallthru
      _
    %1326 = vsyncpa [#allocation5], 1
    %1327 = vsyncpa [#allocation8], 1
    %1328 = vsyncpa [#allocation11], 1
    %1329 = vsyncpa [#allocation6], 1
    %1330 = vsyncpa [#allocation14], 1

</llo_original>
